<compile_context>
chip_gen: v7x
topology: tpu7x:2x2x1
jax: 0.10.0
libtpu: 0.0.40
codegen_flags: <defaults>
</compile_context>

<pallas_src>
import functools
from math import sqrt

import jax
import jax.numpy as jnp
import numpy as np
from jax.experimental import pallas as pl
from jax.experimental.pallas import tpu as pltpu


def _layer_norm(v, w, b, eps=1e-5):
    mu = jnp.mean(v, axis=-1, keepdims=True)
    var = jnp.mean((v - mu) ** 2, axis=-1, keepdims=True)
    return (v - mu) * jax.lax.rsqrt(var + eps) * w + b


# ---------------------------------------------------------------------------
# Kernel: grid = (batch blocks, mlp chunks).  Attention + LN2 run once per batch
# block (k == 0); each grid step then processes one chunk of the MLP width,
# accumulating into a VMEM scratch that is written out on the last chunk.
# ---------------------------------------------------------------------------
def _block_kernel(x_ref, ln1w_ref, ln1b_ref, wqkv_ref, bqkv_ref, wo_ref, bo_ref,
                  ln2w_ref, ln2b_ref, wfc_ref, bfc_ref, wproj_ref, bproj_ref,
                  o_ref, h2_ref, acc_ref, *, d_model, n_head):
    k_idx = pl.program_id(1)
    n_k = pl.num_programs(1)
    b_blk, L, D = x_ref.shape
    BL = b_blk * L
    hd = d_model // n_head
    scale = 1.0 / sqrt(hd)
    bf16 = jnp.bfloat16
    f32 = jnp.float32

    # ------- attention branch + residual + LN2, once per batch block (k == 0) -------
    @pl.when(k_idx == 0)
    def _attention_and_init():
        x = x_ref[...].reshape(BL, D)                              # (BL, D) f32 (free reshape)
        h = _layer_norm(x, ln1w_ref[0], ln1b_ref[0])

        # Fused QKV projection: one 2-D MXU matmul, bf16 in / f32 accumulate.
        qkv = jnp.dot(h.astype(bf16), wqkv_ref[...],
                      preferred_element_type=f32) + bqkv_ref[0]    # (BL, 3D) f32
        qkv = qkv.reshape(b_blk, L, 3 * d_model)

        # Cast to bf16 during the q/k/v split (scale folded into q before the cast).
        q16 = (qkv[:, :, :d_model] * scale).astype(bf16)           # (b, L, D)
        k16 = qkv[:, :, d_model:2 * d_model].astype(bf16)
        v16 = qkv[:, :, 2 * d_model:].astype(bf16)

        def heads(t):                                              # (b, L, D) -> (b*H, L, hd)
            t = jnp.stack([t[:, :, i * hd:(i + 1) * hd] for i in range(n_head)],
                          axis=1)                                  # (b, H, L, hd)
            return t.reshape(b_blk * n_head, L, hd)                # merge leading dims (free)

        q, k, v = heads(q16), heads(k16), heads(v16)

        # Attention batched over (batch, head) in one leading batch dim.
        s = jnp.einsum("bqd,bkd->bqk", q, k, preferred_element_type=f32)   # (bH, L, L)
        s = s - jnp.max(s, axis=-1, keepdims=True)
        p = jnp.exp(s)
        denom = jnp.sum(p, axis=-1, keepdims=True)
        ctx = jnp.einsum("bqk,bkd->bqd", p.astype(bf16), v,
                         preferred_element_type=f32)               # (bH, L, hd)
        # Normalize AFTER the PV matmul: O(bH*L*hd) multiplies instead of O(bH*L*L).
        ctx = ctx * pl.reciprocal(denom, approx=True)              # EUP reciprocal

        # Merge heads back into the lane dim and do ONE fused output projection (K = D).
        ctx = ctx.astype(bf16).reshape(b_blk, n_head, L, hd)
        ctx = jnp.concatenate([ctx[:, i] for i in range(n_head)], axis=-1)  # (b, L, D)
        attn_out = jnp.dot(ctx.reshape(BL, D), wo_ref[...],
                           preferred_element_type=f32) + bo_ref[0]          # (BL, D)

        x1 = x + attn_out                                          # first residual
        h2 = _layer_norm(x1, ln2w_ref[0], ln2b_ref[0])
        h2_ref[...] = h2.astype(bf16)                              # reused by every MLP chunk
        acc_ref[...] = x1 + bproj_ref[0]                           # 2nd residual + c_proj bias

    # ------- MLP, streamed over mlp_width chunks (grid axis 1) -------
    f = jnp.dot(h2_ref[...], wfc_ref[...], preferred_element_type=f32) + bfc_ref[0]
    g = 0.5 * f * (1.0 + jax.lax.erf(f * (1.0 / sqrt(2.0))))       # exact GELU (nn.GELU default)
    acc_ref[...] = acc_ref[...] + jnp.dot(g.astype(bf16), wproj_ref[...],
                                          preferred_element_type=f32)

    @pl.when(k_idx == n_k - 1)
    def _finalize():
        o_ref[...] = acc_ref[...].reshape(b_blk, L, D).astype(o_ref.dtype)


# ---------------------------------------------------------------------------
# VMEM-aware tiling choice (generation-aware: 128 MiB on v5e/v6e, 64 MiB on v7x).
# ---------------------------------------------------------------------------
def _vmem_cap_bytes():
    try:
        return int(pltpu.get_tpu_info().vmem_capacity_bytes)
    except Exception:
        return 64 * 1024 * 1024        # conservative (v7x-sized) fallback


def _vmem_need_bytes(b_blk, chunk, L, D, H, mlp_width):
    bf, f32 = 2, 4
    BL = b_blk * L
    # Double-buffered BlockSpec blocks.
    blocks = 2 * (BL * D * f32) * 2                        # x block + out block
    blocks += 2 * (2 * D * chunk * bf + chunk * f32)       # streamed wfc / wproj / bfc chunks
    blocks += 2 * (3 * D * D + D * D) * bf                 # wqkv + wo (constant index)
    blocks += 2 * 12 * D * f32                             # biases / LN params
    # Persistent scratch.
    scratch = BL * D * (bf + f32)                          # h2 (bf16) + acc (f32)
    # In-kernel temporaries (attention phase vs MLP phase; take the max).
    attn_tmp = (BL * 3 * D * f32 + 3 * BL * D * bf         # qkv f32 + q/k/v bf16
                + 2 * b_blk * H * L * L * f32              # s, p
                + BL * D * (f32 + bf)                      # ctx
                + 2 * BL * D * f32)                        # attn_out, x1
    mlp_tmp = BL * chunk * (f32 + bf) + BL * D * f32
    return blocks + scratch + max(attn_tmp, mlp_tmp)


def _choose_tiling(N, L, D, H, mlp_width, vmem_cap):
    budget = int(0.75 * vmem_cap)
    # Keep >= 2 steps on the parallel batch axis when N allows (v7x has 2 TensorCores).
    b_cands = [b for b in (8, 4, 2, 1) if N % b == 0 and b <= max(1, N // 2)]
    if not b_cands:
        b_cands = [1]
    c_cands = [c for c in (2048, 1024, 512, 256, 128) if mlp_width % c == 0]
    if not c_cands:
        c_cands = [mlp_width]
    for b_blk in b_cands:                   # batch-blocking is the biggest lever ...
        for chunk in c_cands:               # ... then the largest MLP chunk that fits.
            if _vmem_need_bytes(b_blk, chunk, L, D, H, mlp_width) <= budget:
                return b_blk, chunk
    return 1, c_cands[-1]


# ---------------------------------------------------------------------------
# Wrapper: takes x in PyTorch layout (L, N, D), returns (L, N, D).
# ---------------------------------------------------------------------------
def residual_attention_block(x_lnd, params, n_head, attn_mask=None):
    if attn_mask is not None:
        # TODO(synk): additive attn_mask is not wired into the kernel (module forward default is None).
        raise NotImplementedError("attn_mask not supported in this kernel")

    L, N, D = x_lnd.shape
    assert D % n_head == 0
    mlp_width = params["wfc_t"].shape[1]

    vmem_cap = _vmem_cap_bytes()
    b_blk, chunk = _choose_tiling(N, L, D, n_head, mlp_width, vmem_cap)
    n_chunks = mlp_width // chunk
    n_bblocks = N // b_blk

    bf16 = jnp.bfloat16
    x = jnp.transpose(x_lnd, (1, 0, 2)).astype(jnp.float32)       # (N, L, D)

    # bf16 weights (f32 accumulation in-kernel); biases / LN params stay f32.
    wqkv = params["wqkv_t"].astype(bf16)                          # (D, 3D)
    wo = params["wo_t"].astype(bf16)                              # (D, D)
    wfc = params["wfc_t"].astype(bf16)                            # (D, mlp)
    wproj = params["wproj_t"].astype(bf16)                        # (mlp, D)

    kernel = functools.partial(_block_kernel, d_model=D, n_head=n_head)

    const2 = lambda b, k: (0, 0)
    in_specs = [
        pl.BlockSpec((b_blk, L, D), lambda b, k: (b, 0, 0)),      # x (batch block)
        pl.BlockSpec((1, D), const2),                             # ln1 weight
        pl.BlockSpec((1, D), const2),                             # ln1 bias
        pl.BlockSpec((D, 3 * D), const2),                         # in_proj weight^T (bf16)
        pl.BlockSpec((1, 3 * D), const2),                         # in_proj bias
        pl.BlockSpec((D, D), const2),                             # out_proj weight^T (bf16)
        pl.BlockSpec((1, D), const2),                             # out_proj bias
        pl.BlockSpec((1, D), const2),                             # ln2 weight
        pl.BlockSpec((1, D), const2),                             # ln2 bias
        pl.BlockSpec((D, chunk), lambda b, k: (0, k)),            # c_fc weight^T chunk (streamed)
        pl.BlockSpec((1, chunk), lambda b, k: (0, k)),            # c_fc bias chunk
        pl.BlockSpec((chunk, D), lambda b, k: (k, 0)),            # c_proj weight^T chunk (streamed)
        pl.BlockSpec((1, D), const2),                             # c_proj bias
    ]
    # TODO(synk): once pipeline_mode=pl.Buffered(1) is reliably supported, single-buffer the
    # constant-index wqkv / wo blocks to reclaim ~4*D*D*2 bytes of VMEM headroom on v7x.

    # Roofline hints for the XLA scheduler.  MLP chunk weights are re-streamed once per
    # batch block, so count them n_bblocks times.
    flops = int(2 * N * L * (4 * D * D + 2 * L * D + 2 * D * mlp_width))
    transc = int(N * (n_head * L * L + L * mlp_width + n_head * L + 4 * L))
    bytes_accessed = int(
        2 * N * L * D * 4                                          # x in + out
        + n_bblocks * (2 * D * mlp_width * 2 + mlp_width * 4)      # streamed MLP weights + bias
        + (3 * D * D + D * D) * 2 + 12 * D * 4)                    # constant weights / biases

    need = _vmem_need_bytes(b_blk, chunk, L, D, n_head, mlp_width)
    vmem_limit = int(min(int(0.92 * vmem_cap),
                         max(32 * 1024 * 1024, int(1.5 * need))))

    out = pl.pallas_call(
        kernel,
        out_shape=jax.ShapeDtypeStruct((N, L, D), jnp.float32),
        grid_spec=pltpu.PrefetchScalarGridSpec(
            num_scalar_prefetch=0,
            grid=(n_bblocks, n_chunks),
            in_specs=in_specs,
            out_specs=pl.BlockSpec((b_blk, L, D), lambda b, k: (b, 0, 0)),
            scratch_shapes=[pltpu.VMEM((b_blk * L, D), bf16),            # LN2(x1), reused per chunk
                            pltpu.VMEM((b_blk * L, D), jnp.float32)],    # output accumulator
        ),
        compiler_params=pltpu.CompilerParams(
            dimension_semantics=("parallel", "arbitrary"),
            vmem_limit_bytes=vmem_limit,
        ),
        cost_estimate=pl.CostEstimate(flops=flops, transcendentals=transc,
                                      bytes_accessed=bytes_accessed),
    )(
        x,
        params["ln1_w"], params["ln1_b"],
        wqkv, params["bqkv"],
        wo, params["bo"],
        params["ln2_w"], params["ln2_b"],
        wfc, params["bfc"],
        wproj, params["bproj"],
    )
    return jnp.transpose(out, (1, 0, 2))                          # back to (L, N, D)


# ---------------------------------------------------------------------------
# Pure-JAX f32 reference (same math) for a correctness check.
# ---------------------------------------------------------------------------
def reference(x_lnd, params, n_head):
    L, N, D = x_lnd.shape
    hd = D // n_head

    def ln(v, w, b, eps=1e-5):
        mu = v.mean(-1, keepdims=True)
        var = ((v - mu) ** 2).mean(-1, keepdims=True)
        return (v - mu) / jnp.sqrt(var + eps) * w + b

    x = jnp.transpose(x_lnd, (1, 0, 2))                           # (N, L, D)
    h = ln(x, params["ln1_w"][0], params["ln1_b"][0])
    qkv = h @ params["wqkv_t"] + params["bqkv"][0]
    q, k, v = jnp.split(qkv, 3, axis=-1)
    q = q.reshape(N, L, n_head, hd)
    k = k.reshape(N, L, n_head, hd)
    v = v.reshape(N, L, n_head, hd)
    s = jnp.einsum("nqhd,nkhd->nhqk", q, k) / sqrt(hd)
    p = jax.nn.softmax(s, axis=-1)
    ctx = jnp.einsum("nhqk,nkhd->nqhd", p, v).reshape(N, L, D)
    attn = ctx @ params["wo_t"] + params["bo"][0]
    x1 = x + attn
    h2 = ln(x1, params["ln2_w"][0], params["ln2_b"][0])
    f = h2 @ params["wfc_t"] + params["bfc"][0]
    g = 0.5 * f * (1.0 + jax.lax.erf(f / jnp.sqrt(2.0)))
    out = x1 + (g @ params["wproj_t"] + params["bproj"][0])
    return jnp.transpose(out, (1, 0, 2))


def make_params(key, d_model, n_head, mlp_ratio=4.0):
    mlp_width = int(d_model * mlp_ratio)
    ks = jax.random.split(key, 8)
    std = 0.02
    return {
        "ln1_w": jnp.ones((1, d_model), jnp.float32),
        "ln1_b": jnp.zeros((1, d_model), jnp.float32),
        # in_proj weight is (3D, D) in torch; stored pre-transposed (D, 3D)
        "wqkv_t": std * jax.random.normal(ks[0], (d_model, 3 * d_model), jnp.float32),
        "bqkv": std * jax.random.normal(ks[1], (1, 3 * d_model), jnp.float32),
        # out_proj weight (D, D) -> transposed (D, D)
        "wo_t": std * jax.random.normal(ks[2], (d_model, d_model), jnp.float32),
        "bo": std * jax.random.normal(ks[3], (1, d_model), jnp.float32),
        "ln2_w": jnp.ones((1, d_model), jnp.float32),
        "ln2_b": jnp.zeros((1, d_model), jnp.float32),
        # c_fc weight (mlp_width, D) -> transposed (D, mlp_width)
        "wfc_t": std * jax.random.normal(ks[4], (d_model, mlp_width), jnp.float32),
        "bfc": std * jax.random.normal(ks[5], (1, mlp_width), jnp.float32),
        # c_proj weight (D, mlp_width) -> transposed (mlp_width, D)
        "wproj_t": std * jax.random.normal(ks[6], (mlp_width, d_model), jnp.float32),
        "bproj": std * jax.random.normal(ks[7], (1, d_model), jnp.float32),
    }


if __name__ == "__main__":
    def _run_case(L, N, D, NH, seed):
        key = jax.random.PRNGKey(seed)
        kx, kp = jax.random.split(key)
        x = jax.random.normal(kx, (L, N, D), jnp.float32)   # PyTorch layout (L, N, D)
        params = make_params(kp, D, NH)
        out = jax.block_until_ready(residual_attention_block(x, params, NH))
        ref = jax.block_until_ready(reference(x, params, NH))
        assert out.shape == (L, N, D)
        # bf16 weights/operands with f32 accumulation + approx reciprocal -> loosened tolerance.
        np.testing.assert_allclose(np.asarray(out), np.asarray(ref), rtol=2e-2, atol=2e-2)

    # Small base case: seq=8, batch=2, d_model=32, heads=4 (head_dim=8).
    _run_case(L=8, N=2, D=32, NH=4, seed=0)
    # Slightly larger case exercising batch-blocking (B_blk=2) and a lane-aligned d_model.
    _run_case(L=16, N=4, D=128, NH=4, seed=1)

    print("KERNEL_OK")
</pallas_src>

<mosaic_0001>
module attributes {stable_mosaic.version = 11 : i64} {
  func.func @_block_kernel(%arg0: i32, %arg1: i32, %arg2: memref<1x8x32xf32, #tpu.memory_space<vmem>>, %arg3: memref<1x32xf32, #tpu.memory_space<vmem>>, %arg4: memref<1x32xf32, #tpu.memory_space<vmem>>, %arg5: memref<32x96xbf16, #tpu.memory_space<vmem>>, %arg6: memref<1x96xf32, #tpu.memory_space<vmem>>, %arg7: memref<32x32xbf16, #tpu.memory_space<vmem>>, %arg8: memref<1x32xf32, #tpu.memory_space<vmem>>, %arg9: memref<1x32xf32, #tpu.memory_space<vmem>>, %arg10: memref<1x32xf32, #tpu.memory_space<vmem>>, %arg11: memref<32x128xbf16, #tpu.memory_space<vmem>>, %arg12: memref<1x128xf32, #tpu.memory_space<vmem>>, %arg13: memref<128x32xbf16, #tpu.memory_space<vmem>>, %arg14: memref<1x32xf32, #tpu.memory_space<vmem>>, %arg15: memref<1x8x32xf32, #tpu.memory_space<vmem>>, %arg16: memref<8x32xbf16, #tpu.memory_space<vmem>>, %arg17: memref<8x32xf32, #tpu.memory_space<vmem>>) attributes {dimension_semantics = [#tpu.dimension_semantics<parallel>, #tpu.dimension_semantics<arbitrary>], iteration_bounds = array<i64: 2, 1>, scalar_prefetch = 0 : i64, scratch_operands = 2 : i64, tpu.core_type = #tpu.core_type<tc>, window_params = [{transform_indices = @transform_0, window_bounds = array<i64: 1, 8, 32>}, {pipeline_mode = #tpu.pipeline_mode<synchronous>, transform_indices = @transform_1, window_bounds = array<i64: 1, 32>}, {pipeline_mode = #tpu.pipeline_mode<synchronous>, transform_indices = @transform_2, window_bounds = array<i64: 1, 32>}, {pipeline_mode = #tpu.pipeline_mode<synchronous>, transform_indices = @transform_3, window_bounds = array<i64: 32, 96>}, {pipeline_mode = #tpu.pipeline_mode<synchronous>, transform_indices = @transform_4, window_bounds = array<i64: 1, 96>}, {pipeline_mode = #tpu.pipeline_mode<synchronous>, transform_indices = @transform_5, window_bounds = array<i64: 32, 32>}, {pipeline_mode = #tpu.pipeline_mode<synchronous>, transform_indices = @transform_6, window_bounds = array<i64: 1, 32>}, {pipeline_mode = #tpu.pipeline_mode<synchronous>, transform_indices = @transform_7, window_bounds = array<i64: 1, 32>}, {pipeline_mode = #tpu.pipeline_mode<synchronous>, transform_indices = @transform_8, window_bounds = array<i64: 1, 32>}, {transform_indices = @transform_9, window_bounds = array<i64: 32, 128>}, {transform_indices = @transform_10, window_bounds = array<i64: 1, 128>}, {transform_indices = @transform_11, window_bounds = array<i64: 128, 32>}, {pipeline_mode = #tpu.pipeline_mode<synchronous>, transform_indices = @transform_12, window_bounds = array<i64: 1, 32>}, {transform_indices = @transform_13, window_bounds = array<i64: 1, 8, 32>}]} {
    %c0_i32 = arith.constant 0 : i32
    %0 = arith.cmpi eq, %arg1, %c0_i32 : i32
    %1 = arith.extui %0 : i1 to i32
    %c0_i32_0 = arith.constant 0 : i32
    %2 = arith.cmpi ne, %1, %c0_i32_0 : i32
    scf.if %2 {
      %c0_18 = arith.constant 0 : index
      %c0_19 = arith.constant 0 : index
      %c0_20 = arith.constant 0 : index
      %28 = vector.load %arg2[%c0_18, %c0_19, %c0_20] : memref<1x8x32xf32, #tpu.memory_space<vmem>>, vector<1x8x32xf32>
      %29 = vector.shape_cast %28 : vector<1x8x32xf32> to vector<8x32xf32>
      %c0_21 = arith.constant 0 : index
      %c0_22 = arith.constant 0 : index
      %30 = vector.load %arg3[%c0_21, %c0_22] : memref<1x32xf32, #tpu.memory_space<vmem>>, vector<1x32xf32>
      %31 = vector.shape_cast %30 : vector<1x32xf32> to vector<32xf32>
      %c0_23 = arith.constant 0 : index
      %c0_24 = arith.constant 0 : index
      %32 = vector.load %arg4[%c0_23, %c0_24] : memref<1x32xf32, #tpu.memory_space<vmem>>, vector<1x32xf32>
      %33 = vector.shape_cast %32 : vector<1x32xf32> to vector<32xf32>
      %cst_25 = arith.constant dense<0.000000e+00> : vector<8xf32>
      %34 = vector.multi_reduction <add>, %29, %cst_25 [1] : vector<8x32xf32> to vector<8xf32>
      %35 = vector.shape_cast %34 : vector<8xf32> to vector<8x1xf32>
      %cst_26 = arith.constant 3.200000e+01 : f32
      %36 = vector.broadcast %cst_26 : f32 to vector<8x1xf32>
      %37 = arith.divf %35, %36 : vector<8x1xf32>
      %38 = vector.broadcast %37 : vector<8x1xf32> to vector<8x32xf32>
      %39 = arith.subf %29, %38 : vector<8x32xf32>
      %40 = arith.mulf %39, %39 : vector<8x32xf32>
      %cst_27 = arith.constant dense<0.000000e+00> : vector<8xf32>
      %41 = vector.multi_reduction <add>, %40, %cst_27 [1] : vector<8x32xf32> to vector<8xf32>
      %42 = vector.shape_cast %41 : vector<8xf32> to vector<8x1xf32>
      %cst_28 = arith.constant 3.200000e+01 : f32
      %43 = vector.broadcast %cst_28 : f32 to vector<8x1xf32>
      %44 = arith.divf %42, %43 : vector<8x1xf32>
      %45 = vector.broadcast %37 : vector<8x1xf32> to vector<8x32xf32>
      %46 = arith.subf %29, %45 : vector<8x32xf32>
      %cst_29 = arith.constant 9.99999974E-6 : f32
      %47 = vector.broadcast %cst_29 : f32 to vector<8x1xf32>
      %48 = arith.addf %44, %47 : vector<8x1xf32>
      %49 = math.rsqrt %48 : vector<8x1xf32>
      %50 = vector.broadcast %49 : vector<8x1xf32> to vector<8x32xf32>
      %51 = arith.mulf %46, %50 : vector<8x32xf32>
      %52 = vector.shape_cast %31 : vector<32xf32> to vector<1x32xf32>
      %53 = vector.broadcast %52 : vector<1x32xf32> to vector<8x32xf32>
      %54 = arith.mulf %51, %53 : vector<8x32xf32>
      %55 = vector.shape_cast %33 : vector<32xf32> to vector<1x32xf32>
      %56 = vector.broadcast %55 : vector<1x32xf32> to vector<8x32xf32>
      %57 = arith.addf %54, %56 : vector<8x32xf32>
      %58 = arith.truncf %57 : vector<8x32xf32> to vector<8x32xbf16>
      %c0_30 = arith.constant 0 : index
      %c0_31 = arith.constant 0 : index
      %59 = vector.load %arg5[%c0_30, %c0_31] : memref<32x96xbf16, #tpu.memory_space<vmem>>, vector<32x96xbf16>
      %cst_32 = arith.constant dense<0.000000e+00> : vector<8x96xf32>
      %60 = tpu.matmul %58, %59, %cst_32 {dimension_numbers = #tpu.dot_dimension_numbers<[1], [0], [0], [1], [0, 0, 1, 1], [], []>} : vector<8x32xbf16>, vector<32x96xbf16>, vector<8x96xf32> -> vector<8x96xf32>
      %c0_33 = arith.constant 0 : index
      %c0_34 = arith.constant 0 : index
      %61 = vector.load %arg6[%c0_33, %c0_34] : memref<1x96xf32, #tpu.memory_space<vmem>>, vector<1x96xf32>
      %62 = vector.shape_cast %61 : vector<1x96xf32> to vector<96xf32>
      %63 = vector.shape_cast %62 : vector<96xf32> to vector<1x96xf32>
      %64 = vector.broadcast %63 : vector<1x96xf32> to vector<8x96xf32>
      %65 = arith.addf %60, %64 : vector<8x96xf32>
      %66 = vector.shape_cast %65 : vector<8x96xf32> to vector<1x8x96xf32>
      %67 = vector.extract_strided_slice %66 {offsets = [0, 0, 0], sizes = [1, 8, 32], strides = [1, 1, 1]} : vector<1x8x96xf32> to vector<1x8x32xf32>
      %cst_35 = arith.constant 0.353553385 : f32
      %68 = vector.broadcast %cst_35 : f32 to vector<1x8x32xf32>
      %69 = arith.mulf %67, %68 : vector<1x8x32xf32>
      %70 = arith.truncf %69 : vector<1x8x32xf32> to vector<1x8x32xbf16>
      %71 = vector.extract_strided_slice %66 {offsets = [0, 0, 32], sizes = [1, 8, 32], strides = [1, 1, 1]} : vector<1x8x96xf32> to vector<1x8x32xf32>
      %72 = arith.truncf %71 : vector<1x8x32xf32> to vector<1x8x32xbf16>
      %73 = vector.extract_strided_slice %66 {offsets = [0, 0, 64], sizes = [1, 8, 32], strides = [1, 1, 1]} : vector<1x8x96xf32> to vector<1x8x32xf32>
      %74 = arith.truncf %73 : vector<1x8x32xf32> to vector<1x8x32xbf16>
      %75 = vector.extract_strided_slice %70 {offsets = [0, 0, 0], sizes = [1, 8, 8], strides = [1, 1, 1]} : vector<1x8x32xbf16> to vector<1x8x8xbf16>
      %76 = vector.extract_strided_slice %70 {offsets = [0, 0, 8], sizes = [1, 8, 8], strides = [1, 1, 1]} : vector<1x8x32xbf16> to vector<1x8x8xbf16>
      %77 = vector.extract_strided_slice %70 {offsets = [0, 0, 16], sizes = [1, 8, 8], strides = [1, 1, 1]} : vector<1x8x32xbf16> to vector<1x8x8xbf16>
      %78 = vector.extract_strided_slice %70 {offsets = [0, 0, 24], sizes = [1, 8, 8], strides = [1, 1, 1]} : vector<1x8x32xbf16> to vector<1x8x8xbf16>
      %79 = vector.shape_cast %75 : vector<1x8x8xbf16> to vector<1x1x8x8xbf16>
      %80 = vector.shape_cast %76 : vector<1x8x8xbf16> to vector<1x1x8x8xbf16>
      %81 = vector.shape_cast %77 : vector<1x8x8xbf16> to vector<1x1x8x8xbf16>
      %82 = vector.shape_cast %78 : vector<1x8x8xbf16> to vector<1x1x8x8xbf16>
      %83 = tpu.concatenate %79, %80, %81, %82 in 1 : vector<1x1x8x8xbf16>, vector<1x1x8x8xbf16>, vector<1x1x8x8xbf16>, vector<1x1x8x8xbf16> -> vector<1x4x8x8xbf16>
      %84 = vector.shape_cast %83 : vector<1x4x8x8xbf16> to vector<4x8x8xbf16>
      %85 = vector.extract_strided_slice %72 {offsets = [0, 0, 0], sizes = [1, 8, 8], strides = [1, 1, 1]} : vector<1x8x32xbf16> to vector<1x8x8xbf16>
      %86 = vector.extract_strided_slice %72 {offsets = [0, 0, 8], sizes = [1, 8, 8], strides = [1, 1, 1]} : vector<1x8x32xbf16> to vector<1x8x8xbf16>
      %87 = vector.extract_strided_slice %72 {offsets = [0, 0, 16], sizes = [1, 8, 8], strides = [1, 1, 1]} : vector<1x8x32xbf16> to vector<1x8x8xbf16>
      %88 = vector.extract_strided_slice %72 {offsets = [0, 0, 24], sizes = [1, 8, 8], strides = [1, 1, 1]} : vector<1x8x32xbf16> to vector<1x8x8xbf16>
      %89 = vector.shape_cast %85 : vector<1x8x8xbf16> to vector<1x1x8x8xbf16>
      %90 = vector.shape_cast %86 : vector<1x8x8xbf16> to vector<1x1x8x8xbf16>
      %91 = vector.shape_cast %87 : vector<1x8x8xbf16> to vector<1x1x8x8xbf16>
      %92 = vector.shape_cast %88 : vector<1x8x8xbf16> to vector<1x1x8x8xbf16>
      %93 = tpu.concatenate %89, %90, %91, %92 in 1 : vector<1x1x8x8xbf16>, vector<1x1x8x8xbf16>, vector<1x1x8x8xbf16>, vector<1x1x8x8xbf16> -> vector<1x4x8x8xbf16>
      %94 = vector.shape_cast %93 : vector<1x4x8x8xbf16> to vector<4x8x8xbf16>
      %95 = vector.extract_strided_slice %74 {offsets = [0, 0, 0], sizes = [1, 8, 8], strides = [1, 1, 1]} : vector<1x8x32xbf16> to vector<1x8x8xbf16>
      %96 = vector.extract_strided_slice %74 {offsets = [0, 0, 8], sizes = [1, 8, 8], strides = [1, 1, 1]} : vector<1x8x32xbf16> to vector<1x8x8xbf16>
      %97 = vector.extract_strided_slice %74 {offsets = [0, 0, 16], sizes = [1, 8, 8], strides = [1, 1, 1]} : vector<1x8x32xbf16> to vector<1x8x8xbf16>
      %98 = vector.extract_strided_slice %74 {offsets = [0, 0, 24], sizes = [1, 8, 8], strides = [1, 1, 1]} : vector<1x8x32xbf16> to vector<1x8x8xbf16>
      %99 = vector.shape_cast %95 : vector<1x8x8xbf16> to vector<1x1x8x8xbf16>
      %100 = vector.shape_cast %96 : vector<1x8x8xbf16> to vector<1x1x8x8xbf16>
      %101 = vector.shape_cast %97 : vector<1x8x8xbf16> to vector<1x1x8x8xbf16>
      %102 = vector.shape_cast %98 : vector<1x8x8xbf16> to vector<1x1x8x8xbf16>
      %103 = tpu.concatenate %99, %100, %101, %102 in 1 : vector<1x1x8x8xbf16>, vector<1x1x8x8xbf16>, vector<1x1x8x8xbf16>, vector<1x1x8x8xbf16> -> vector<1x4x8x8xbf16>
      %104 = vector.shape_cast %103 : vector<1x4x8x8xbf16> to vector<4x8x8xbf16>
      "tpu.trace_start"() <{level = 10 : i32, message = "bqd,bkd->bqk"}> : () -> ()
      %cst_36 = arith.constant dense<0.000000e+00> : vector<4x8x8xf32>
      %105 = tpu.matmul %84, %94, %cst_36 {dimension_numbers = #tpu.dot_dimension_numbers<[2], [2], [1], [1], [0, 0, 0, 1, 1, 1], [0], [0]>} : vector<4x8x8xbf16>, vector<4x8x8xbf16>, vector<4x8x8xf32> -> vector<4x8x8xf32>
      "tpu.trace_stop"() : () -> ()
      %cst_37 = arith.constant dense<0xFF800000> : vector<4x8xf32>
      %106 = vector.multi_reduction <maximumf>, %105, %cst_37 [2] : vector<4x8x8xf32> to vector<4x8xf32>
      %107 = vector.shape_cast %106 : vector<4x8xf32> to vector<4x8x1xf32>
      %108 = vector.broadcast %107 : vector<4x8x1xf32> to vector<4x8x8xf32>
      %109 = arith.subf %105, %108 : vector<4x8x8xf32>
      %110 = math.exp %109 : vector<4x8x8xf32>
      %cst_38 = arith.constant dense<0.000000e+00> : vector<4x8xf32>
      %111 = vector.multi_reduction <add>, %110, %cst_38 [2] : vector<4x8x8xf32> to vector<4x8xf32>
      %112 = vector.shape_cast %111 : vector<4x8xf32> to vector<4x8x1xf32>
      %113 = arith.truncf %110 : vector<4x8x8xf32> to vector<4x8x8xbf16>
      "tpu.trace_start"() <{level = 10 : i32, message = "bqk,bkd->bqd"}> : () -> ()
      %cst_39 = arith.constant dense<0.000000e+00> : vector<4x8x8xf32>
      %114 = tpu.matmul %113, %104, %cst_39 {dimension_numbers = #tpu.dot_dimension_numbers<[2], [1], [1], [2], [0, 0, 0, 1, 1, 2], [0], [0]>} : vector<4x8x8xbf16>, vector<4x8x8xbf16>, vector<4x8x8xf32> -> vector<4x8x8xf32>
      "tpu.trace_stop"() : () -> ()
      %115 = tpu.reciprocal %112 {approx = true} : vector<4x8x1xf32> -> vector<4x8x1xf32>
      %116 = vector.broadcast %115 : vector<4x8x1xf32> to vector<4x8x8xf32>
      %117 = arith.mulf %114, %116 : vector<4x8x8xf32>
      %118 = arith.truncf %117 : vector<4x8x8xf32> to vector<4x8x8xbf16>
      %119 = vector.shape_cast %118 : vector<4x8x8xbf16> to vector<1x4x8x8xbf16>
      %120 = vector.extract_strided_slice %119 {offsets = [0, 0, 0, 0], sizes = [1, 1, 8, 8], strides = [1, 1, 1, 1]} : vector<1x4x8x8xbf16> to vector<1x1x8x8xbf16>
      %121 = vector.shape_cast %120 : vector<1x1x8x8xbf16> to vector<1x8x8xbf16>
      %122 = vector.extract_strided_slice %119 {offsets = [0, 1, 0, 0], sizes = [1, 1, 8, 8], strides = [1, 1, 1, 1]} : vector<1x4x8x8xbf16> to vector<1x1x8x8xbf16>
      %123 = vector.shape_cast %122 : vector<1x1x8x8xbf16> to vector<1x8x8xbf16>
      %124 = vector.extract_strided_slice %119 {offsets = [0, 2, 0, 0], sizes = [1, 1, 8, 8], strides = [1, 1, 1, 1]} : vector<1x4x8x8xbf16> to vector<1x1x8x8xbf16>
      %125 = vector.shape_cast %124 : vector<1x1x8x8xbf16> to vector<1x8x8xbf16>
      %126 = vector.extract_strided_slice %119 {offsets = [0, 3, 0, 0], sizes = [1, 1, 8, 8], strides = [1, 1, 1, 1]} : vector<1x4x8x8xbf16> to vector<1x1x8x8xbf16>
      %127 = vector.shape_cast %126 : vector<1x1x8x8xbf16> to vector<1x8x8xbf16>
      %128 = tpu.concatenate %121, %123, %125, %127 in 2 : vector<1x8x8xbf16>, vector<1x8x8xbf16>, vector<1x8x8xbf16>, vector<1x8x8xbf16> -> vector<1x8x32xbf16>
      %129 = vector.shape_cast %128 : vector<1x8x32xbf16> to vector<8x32xbf16>
      %c0_40 = arith.constant 0 : index
      %c0_41 = arith.constant 0 : index
      %130 = vector.load %arg7[%c0_40, %c0_41] : memref<32x32xbf16, #tpu.memory_space<vmem>>, vector<32x32xbf16>
      %cst_42 = arith.constant dense<0.000000e+00> : vector<8x32xf32>
      %131 = tpu.matmul %129, %130, %cst_42 {dimension_numbers = #tpu.dot_dimension_numbers<[1], [0], [0], [1], [0, 0, 1, 1], [], []>} : vector<8x32xbf16>, vector<32x32xbf16>, vector<8x32xf32> -> vector<8x32xf32>
      %c0_43 = arith.constant 0 : index
      %c0_44 = arith.constant 0 : index
      %132 = vector.load %arg8[%c0_43, %c0_44] : memref<1x32xf32, #tpu.memory_space<vmem>>, vector<1x32xf32>
      %133 = vector.shape_cast %132 : vector<1x32xf32> to vector<32xf32>
      %134 = vector.shape_cast %133 : vector<32xf32> to vector<1x32xf32>
      %135 = vector.broadcast %134 : vector<1x32xf32> to vector<8x32xf32>
      %136 = arith.addf %131, %135 : vector<8x32xf32>
      %137 = arith.addf %29, %136 : vector<8x32xf32>
      %c0_45 = arith.constant 0 : index
      %c0_46 = arith.constant 0 : index
      %138 = vector.load %arg9[%c0_45, %c0_46] : memref<1x32xf32, #tpu.memory_space<vmem>>, vector<1x32xf32>
      %139 = vector.shape_cast %138 : vector<1x32xf32> to vector<32xf32>
      %c0_47 = arith.constant 0 : index
      %c0_48 = arith.constant 0 : index
      %140 = vector.load %arg10[%c0_47, %c0_48] : memref<1x32xf32, #tpu.memory_space<vmem>>, vector<1x32xf32>
      %141 = vector.shape_cast %140 : vector<1x32xf32> to vector<32xf32>
      %cst_49 = arith.constant dense<0.000000e+00> : vector<8xf32>
      %142 = vector.multi_reduction <add>, %137, %cst_49 [1] : vector<8x32xf32> to vector<8xf32>
      %143 = vector.shape_cast %142 : vector<8xf32> to vector<8x1xf32>
      %cst_50 = arith.constant 3.200000e+01 : f32
      %144 = vector.broadcast %cst_50 : f32 to vector<8x1xf32>
      %145 = arith.divf %143, %144 : vector<8x1xf32>
      %146 = vector.broadcast %145 : vector<8x1xf32> to vector<8x32xf32>
      %147 = arith.subf %137, %146 : vector<8x32xf32>
      %148 = arith.mulf %147, %147 : vector<8x32xf32>
      %cst_51 = arith.constant dense<0.000000e+00> : vector<8xf32>
      %149 = vector.multi_reduction <add>, %148, %cst_51 [1] : vector<8x32xf32> to vector<8xf32>
      %150 = vector.shape_cast %149 : vector<8xf32> to vector<8x1xf32>
      %cst_52 = arith.constant 3.200000e+01 : f32
      %151 = vector.broadcast %cst_52 : f32 to vector<8x1xf32>
      %152 = arith.divf %150, %151 : vector<8x1xf32>
      %153 = vector.broadcast %145 : vector<8x1xf32> to vector<8x32xf32>
      %154 = arith.subf %137, %153 : vector<8x32xf32>
      %cst_53 = arith.constant 9.99999974E-6 : f32
      %155 = vector.broadcast %cst_53 : f32 to vector<8x1xf32>
      %156 = arith.addf %152, %155 : vector<8x1xf32>
      %157 = math.rsqrt %156 : vector<8x1xf32>
      %158 = vector.broadcast %157 : vector<8x1xf32> to vector<8x32xf32>
      %159 = arith.mulf %154, %158 : vector<8x32xf32>
      %160 = vector.shape_cast %139 : vector<32xf32> to vector<1x32xf32>
      %161 = vector.broadcast %160 : vector<1x32xf32> to vector<8x32xf32>
      %162 = arith.mulf %159, %161 : vector<8x32xf32>
      %163 = vector.shape_cast %141 : vector<32xf32> to vector<1x32xf32>
      %164 = vector.broadcast %163 : vector<1x32xf32> to vector<8x32xf32>
      %165 = arith.addf %162, %164 : vector<8x32xf32>
      %166 = arith.truncf %165 : vector<8x32xf32> to vector<8x32xbf16>
      %c0_54 = arith.constant 0 : index
      %c0_55 = arith.constant 0 : index
      %167 = vector.load %arg16[%c0_54, %c0_55] : memref<8x32xbf16, #tpu.memory_space<vmem>>, vector<8x32xbf16>
      tpu.vector_store %arg16[%c0_54, %c0_55], %166 {strides = array<i32>} : memref<8x32xbf16, #tpu.memory_space<vmem>>, vector<8x32xbf16>,
      %c0_56 = arith.constant 0 : index
      %c0_57 = arith.constant 0 : index
      %168 = vector.load %arg14[%c0_56, %c0_57] : memref<1x32xf32, #tpu.memory_space<vmem>>, vector<1x32xf32>
      %169 = vector.shape_cast %168 : vector<1x32xf32> to vector<32xf32>
      %170 = vector.shape_cast %169 : vector<32xf32> to vector<1x32xf32>
      %171 = vector.broadcast %170 : vector<1x32xf32> to vector<8x32xf32>
      %172 = arith.addf %137, %171 : vector<8x32xf32>
      %c0_58 = arith.constant 0 : index
      %c0_59 = arith.constant 0 : index
      %173 = vector.load %arg17[%c0_58, %c0_59] : memref<8x32xf32, #tpu.memory_space<vmem>>, vector<8x32xf32>
      tpu.vector_store %arg17[%c0_58, %c0_59], %172 {strides = array<i32>} : memref<8x32xf32, #tpu.memory_space<vmem>>, vector<8x32xf32>,
    } else {
    }
    %c0 = arith.constant 0 : index
    %c0_1 = arith.constant 0 : index
    %3 = vector.load %arg16[%c0, %c0_1] : memref<8x32xbf16, #tpu.memory_space<vmem>>, vector<8x32xbf16>
    %c0_2 = arith.constant 0 : index
    %c0_3 = arith.constant 0 : index
    %4 = vector.load %arg11[%c0_2, %c0_3] : memref<32x128xbf16, #tpu.memory_space<vmem>>, vector<32x128xbf16>
    %cst = arith.constant dense<0.000000e+00> : vector<8x128xf32>
    %5 = tpu.matmul %3, %4, %cst {dimension_numbers = #tpu.dot_dimension_numbers<[1], [0], [0], [1], [0, 0, 1, 1], [], []>} : vector<8x32xbf16>, vector<32x128xbf16>, vector<8x128xf32> -> vector<8x128xf32>
    %c0_4 = arith.constant 0 : index
    %c0_5 = arith.constant 0 : index
    %6 = vector.load %arg12[%c0_4, %c0_5] : memref<1x128xf32, #tpu.memory_space<vmem>>, vector<1x128xf32>
    %7 = vector.shape_cast %6 : vector<1x128xf32> to vector<128xf32>
    %8 = vector.shape_cast %7 : vector<128xf32> to vector<1x128xf32>
    %9 = vector.broadcast %8 : vector<1x128xf32> to vector<8x128xf32>
    %10 = arith.addf %5, %9 : vector<8x128xf32>
    %cst_6 = arith.constant 5.000000e-01 : f32
    %11 = vector.broadcast %cst_6 : f32 to vector<8x128xf32>
    %12 = arith.mulf %11, %10 : vector<8x128xf32>
    %cst_7 = arith.constant 0.707106769 : f32
    %13 = vector.broadcast %cst_7 : f32 to vector<8x128xf32>
    %14 = arith.mulf %10, %13 : vector<8x128xf32>
    %15 = math.erf %14 : vector<8x128xf32>
    %cst_8 = arith.constant 1.000000e+00 : f32
    %16 = vector.broadcast %cst_8 : f32 to vector<8x128xf32>
    %17 = arith.addf %16, %15 : vector<8x128xf32>
    %18 = arith.mulf %12, %17 : vector<8x128xf32>
    %c0_9 = arith.constant 0 : index
    %c0_10 = arith.constant 0 : index
    %19 = vector.load %arg17[%c0_9, %c0_10] : memref<8x32xf32, #tpu.memory_space<vmem>>, vector<8x32xf32>
    %20 = arith.truncf %18 : vector<8x128xf32> to vector<8x128xbf16>
    %c0_11 = arith.constant 0 : index
    %c0_12 = arith.constant 0 : index
    %21 = vector.load %arg13[%c0_11, %c0_12] : memref<128x32xbf16, #tpu.memory_space<vmem>>, vector<128x32xbf16>
    %cst_13 = arith.constant dense<0.000000e+00> : vector<8x32xf32>
    %22 = tpu.matmul %20, %21, %cst_13 {dimension_numbers = #tpu.dot_dimension_numbers<[1], [0], [0], [1], [0, 0, 1, 1], [], []>} : vector<8x128xbf16>, vector<128x32xbf16>, vector<8x32xf32> -> vector<8x32xf32>
    %23 = arith.addf %19, %22 : vector<8x32xf32>
    %c0_14 = arith.constant 0 : index
    %c0_15 = arith.constant 0 : index
    %24 = vector.load %arg17[%c0_14, %c0_15] : memref<8x32xf32, #tpu.memory_space<vmem>>, vector<8x32xf32>
    tpu.vector_store %arg17[%c0_14, %c0_15], %23 {strides = array<i32>} : memref<8x32xf32, #tpu.memory_space<vmem>>, vector<8x32xf32>,
    %c0_i32_16 = arith.constant 0 : i32
    %25 = arith.cmpi eq, %arg1, %c0_i32_16 : i32
    %26 = arith.extui %25 : i1 to i32
    %c0_i32_17 = arith.constant 0 : i32
    %27 = arith.cmpi ne, %26, %c0_i32_17 : i32
    scf.if %27 {
      %c0_18 = arith.constant 0 : index
      %c0_19 = arith.constant 0 : index
      %28 = vector.load %arg17[%c0_18, %c0_19] : memref<8x32xf32, #tpu.memory_space<vmem>>, vector<8x32xf32>
      %29 = vector.shape_cast %28 : vector<8x32xf32> to vector<1x8x32xf32>
      %c0_20 = arith.constant 0 : index
      %c0_21 = arith.constant 0 : index
      %c0_22 = arith.constant 0 : index
      %30 = vector.load %arg15[%c0_20, %c0_21, %c0_22] : memref<1x8x32xf32, #tpu.memory_space<vmem>>, vector<1x8x32xf32>
      tpu.vector_store %arg15[%c0_20, %c0_21, %c0_22], %29 {strides = array<i32>} : memref<1x8x32xf32, #tpu.memory_space<vmem>>, vector<1x8x32xf32>,
    } else {
    }
    return
  }
  func.func @transform_0(%arg0: i32, %arg1: i32) -> (i32, i32, i32) {
    %c0_i32 = arith.constant 0 : i32
    %c0_i32_0 = arith.constant 0 : i32
    %c0_i32_1 = arith.constant 0 : i32
    return %arg0, %c0_i32, %c0_i32_0 : i32, i32, i32
  }
  func.func @transform_1(%arg0: i32, %arg1: i32) -> (i32, i32) {
    %c0_i32 = arith.constant 0 : i32
    %c0_i32_0 = arith.constant 0 : i32
    %c0_i32_1 = arith.constant 0 : i32
    return %c0_i32, %c0_i32_0 : i32, i32
  }
  func.func @transform_2(%arg0: i32, %arg1: i32) -> (i32, i32) {
    %c0_i32 = arith.constant 0 : i32
    %c0_i32_0 = arith.constant 0 : i32
    %c0_i32_1 = arith.constant 0 : i32
    return %c0_i32, %c0_i32_0 : i32, i32
  }
  func.func @transform_3(%arg0: i32, %arg1: i32) -> (i32, i32) {
    %c0_i32 = arith.constant 0 : i32
    %c0_i32_0 = arith.constant 0 : i32
    %c0_i32_1 = arith.constant 0 : i32
    return %c0_i32, %c0_i32_0 : i32, i32
  }
  func.func @transform_4(%arg0: i32, %arg1: i32) -> (i32, i32) {
    %c0_i32 = arith.constant 0 : i32
    %c0_i32_0 = arith.constant 0 : i32
    %c0_i32_1 = arith.constant 0 : i32
    return %c0_i32, %c0_i32_0 : i32, i32
  }
  func.func @transform_5(%arg0: i32, %arg1: i32) -> (i32, i32) {
    %c0_i32 = arith.constant 0 : i32
    %c0_i32_0 = arith.constant 0 : i32
    %c0_i32_1 = arith.constant 0 : i32
    return %c0_i32, %c0_i32_0 : i32, i32
  }
  func.func @transform_6(%arg0: i32, %arg1: i32) -> (i32, i32) {
    %c0_i32 = arith.constant 0 : i32
    %c0_i32_0 = arith.constant 0 : i32
    %c0_i32_1 = arith.constant 0 : i32
    return %c0_i32, %c0_i32_0 : i32, i32
  }
  func.func @transform_7(%arg0: i32, %arg1: i32) -> (i32, i32) {
    %c0_i32 = arith.constant 0 : i32
    %c0_i32_0 = arith.constant 0 : i32
    %c0_i32_1 = arith.constant 0 : i32
    return %c0_i32, %c0_i32_0 : i32, i32
  }
  func.func @transform_8(%arg0: i32, %arg1: i32) -> (i32, i32) {
    %c0_i32 = arith.constant 0 : i32
    %c0_i32_0 = arith.constant 0 : i32
    %c0_i32_1 = arith.constant 0 : i32
    return %c0_i32, %c0_i32_0 : i32, i32
  }
  func.func @transform_9(%arg0: i32, %arg1: i32) -> (i32, i32) {
    %c0_i32 = arith.constant 0 : i32
    %c0_i32_0 = arith.constant 0 : i32
    return %c0_i32, %arg1 : i32, i32
  }
  func.func @transform_10(%arg0: i32, %arg1: i32) -> (i32, i32) {
    %c0_i32 = arith.constant 0 : i32
    %c0_i32_0 = arith.constant 0 : i32
    return %c0_i32, %arg1 : i32, i32
  }
  func.func @transform_11(%arg0: i32, %arg1: i32) -> (i32, i32) {
    %c0_i32 = arith.constant 0 : i32
    %c0_i32_0 = arith.constant 0 : i32
    return %arg1, %c0_i32 : i32, i32
  }
  func.func @transform_12(%arg0: i32, %arg1: i32) -> (i32, i32) {
    %c0_i32 = arith.constant 0 : i32
    %c0_i32_0 = arith.constant 0 : i32
    %c0_i32_1 = arith.constant 0 : i32
    return %c0_i32, %c0_i32_0 : i32, i32
  }
  func.func @transform_13(%arg0: i32, %arg1: i32) -> (i32, i32, i32) {
    %c0_i32 = arith.constant 0 : i32
    %c0_i32_0 = arith.constant 0 : i32
    %c0_i32_1 = arith.constant 0 : i32
    return %arg0, %c0_i32, %c0_i32_0 : i32, i32, i32
  }
}

</mosaic_0001>

<llo_original>
// kernel: tpu_custom_call.1
$region0: #{tpu_custom_call.1}
  #allocation0 [shape = 'u32[]', space=smem, size = 0x4, offset = 0x4, fixed_abs, tag = 'smem constant byte address 0x4 - core index']
  #allocation1 [shape = 'u32[144,128]{1,0:T(1,128)}', space=vmem, size = 0x12000, scoped, tag = 'internal scratch']
  #allocation2 [shape = 'bf16[8,32]{1,0:T(8,128)(2,1)}', space=vmem, size = 0x800, scoped, tag = 'scratch operand']
  #allocation3 [shape = 'f32[8,32]{1,0:T(8,128)}', space=vmem, size = 0x1000, scoped, tag = 'scratch operand']
  %s0 = inlined_call_operand.vmem [shape: f32[2,8,32], index: 0, kind: input, shape index: {}]
  %s1 = inlined_call_operand.vmem [shape: f32[1,32], index: 1, kind: input, shape index: {}]
  %s2 = inlined_call_operand.vmem [shape: f32[1,32], index: 2, kind: input, shape index: {}]
  %s3 = inlined_call_operand.vmem [shape: bf16[32,96], index: 3, kind: input, shape index: {}]
  %s4 = inlined_call_operand.vmem [shape: f32[1,96], index: 4, kind: input, shape index: {}]
  %s5 = inlined_call_operand.vmem [shape: bf16[32,32], index: 5, kind: input, shape index: {}]
  %s6 = inlined_call_operand.vmem [shape: f32[1,32], index: 6, kind: input, shape index: {}]
  %s7 = inlined_call_operand.vmem [shape: f32[1,32], index: 7, kind: input, shape index: {}]
  %s8 = inlined_call_operand.vmem [shape: f32[1,32], index: 8, kind: input, shape index: {}]
  %s9 = inlined_call_operand.vmem [shape: bf16[32,128], index: 9, kind: input, shape index: {}]
  %s10 = inlined_call_operand.vmem [shape: f32[1,128], index: 10, kind: input, shape index: {}]
  %s11 = inlined_call_operand.vmem [shape: bf16[128,32], index: 11, kind: input, shape index: {}]
  %s12 = inlined_call_operand.vmem [shape: f32[1,32], index: 12, kind: input, shape index: {}]
  %s13 = inlined_call_operand.hbm [shape: f32[2,8,32], index: 13, kind: output, shape index: {}]
  %s14 = sld [smem:[#allocation0]]
  $region93: #{tpu_custom_call.1} parent=0
    _
  %s16 = ssub.s32 1, %s14
  %s17 = scalar_select 0, %s16, %s14
  $region1: #{tpu_custom_call.1} parent=0
    #allocation4 [shape = 'u8[8192]{0}', space=vmem, size = 0x2000, scoped, tag = 'output window, operand 0']
    #allocation5 [shape = 's32[2]{0}', space=sflag, size = 0x8, scoped, tag = 'scoped memory for tpu_custom_call.1']
    %18 = vsyncpa [#allocation5], 0
    %s19 = scalar_lea.sflag [#allocation5], 1
    %20 = vsyncpa %s19, 0
    loop: start=0, step=1, limit=4
    $region2: #{tpu_custom_call.1} parent=1 // loop_pre_header
      _
    $region3: #{tpu_custom_call.1} parent=1 // loop_header
      %s22 = sphi 0, %s26
      %p23 = scmp.ge.s32.totalorder %s22, 4
      %s29 = sphi 0, %s41
      %s30 = sphi 0, %s37
      %s31 = sphi 0, %s29
      %s32 = sphi 0, %s30
      %s33 = sphi 0, %s31
      %s34 = sphi 0, %s32
      %s44 = sphi 0, %s46
      %s47 = sphi 0, %s44
      %s48 = sphi 0, %s47
      %s64 = sphi 0, %s48
      %s68 = sphi 0, %s68
      %s70 = sphi 0, %s68
      %s71 = sphi 0, %s70
      %s85 = sphi 0, %s71
      %s89 = sphi 0, %s89
      %s91 = sphi 0, %s89
      %s92 = sphi 0, %s91
      %s106 = sphi 0, %s92
      %s110 = sphi 0, %s110
      %s112 = sphi 0, %s110
      %s113 = sphi 0, %s112
      %s127 = sphi 0, %s113
      %s131 = sphi 0, %s131
      %s133 = sphi 0, %s131
      %s134 = sphi 0, %s133
      %s148 = sphi 0, %s134
      %s152 = sphi 0, %s152
      %s154 = sphi 0, %s152
      %s155 = sphi 0, %s154
      %s169 = sphi 0, %s155
      %s173 = sphi 0, %s173
      %s175 = sphi 0, %s173
      %s176 = sphi 0, %s175
      %s190 = sphi 0, %s176
      %s194 = sphi 0, %s194
      %s196 = sphi 0, %s194
      %s197 = sphi 0, %s196
      %s211 = sphi 0, %s197
      %s215 = sphi 0, %s215
      %s217 = sphi 0, %s215
      %s218 = sphi 0, %s217
      %s232 = sphi 0, %s218
      %s238 = sphi 0, %s240
      %s241 = sphi 0, %s238
      %s242 = sphi 0, %s241
      %s258 = sphi 0, %s242
      %s264 = sphi 0, %s266
      %s267 = sphi 0, %s264
      %s268 = sphi 0, %s267
      %s284 = sphi 0, %s268
      %s290 = sphi 0, %s292
      %s293 = sphi 0, %s290
      %s294 = sphi 0, %s293
      %s310 = sphi 0, %s294
      %s314 = sphi 0, %s314
      %s316 = sphi 0, %s314
      %s317 = sphi 0, %s316
      %s331 = sphi 0, %s317
      %s337 = sphi 0, %s339
      %s340 = sphi 0, %s337
      %s341 = sphi 0, %s340
      %s357 = sphi 0, %s341
    $region4: #{tpu_custom_call.1} parent=1 // loop_header_branch
      %25 = sbr.rel (%p23) target = $region8
    $region5: #{tpu_custom_call.1} parent=1 // loop_body
      %s27 = ssub.s32 %s22, 1
      %s28 = ssub.s32 %s22, 2
      %s35 = sadd.s32 1, %s30
      %p36 = scmp.ge.s32.totalorder %s35, 1
      %s37 = scalar_select %p36, 0, %s35
      %s38 = sadd.s32 1, %s29
      %s39 = scalar_select %p36, %s38, %s29
      %p40 = scmp.ge.s32.totalorder %s39, 2
      %s41 = scalar_select %p40, 0, %s39
      %s42 = ssub.s32 %s29, %s41
      %p43 = scmp.eq.s32.totalorder %s42, 0
      %s45 = sadd.s32 %s44, 1
      %s46 = scalar_select %p43, %s44, %s45
      %p49 = pneg %p43
      %p50 = scmp.eq.s32.totalorder %s22, 1
      %p51 = por %p49, %p50
      %p52 = scmp.ne.s32.totalorder %s44, %s47
      %p53 = scmp.eq.s32.totalorder %s22, 0
      %p54 = por %p52, %p53
      %p55 = scmp.ne.s32.totalorder %s44, %s47
      %p56 = scmp.eq.s32.totalorder %s27, 1
      %p57 = por %p55, %p56
      %p58 = scmp.ne.s32.totalorder %s47, %s48
      %p59 = scmp.eq.s32.totalorder %s27, 0
      %p60 = por %p58, %p59
      %p61 = scmp.ne.s32.totalorder %s47, %s48
      %p62 = scmp.eq.s32.totalorder %s28, 1
      %p63 = por %p61, %p62
      %p65 = scmp.ne.s32.totalorder %s48, %s64
      %p66 = scmp.eq.s32.totalorder %s28, 0
      %p67 = por %p65, %p66
      %s69 = sadd.s32 %s68, 1
      %p72 = scmp.eq.s32.totalorder %s22, 1
      %p73 = scmp.ne.s32.totalorder %s68, %s70
      %p74 = scmp.eq.s32.totalorder %s22, 0
      %p75 = por %p73, %p74
      %p76 = scmp.ne.s32.totalorder %s68, %s70
      %p77 = scmp.eq.s32.totalorder %s27, 1
      %p78 = por %p76, %p77
      %p79 = scmp.ne.s32.totalorder %s70, %s71
      %p80 = scmp.eq.s32.totalorder %s27, 0
      %p81 = por %p79, %p80
      %p82 = scmp.ne.s32.totalorder %s70, %s71
      %p83 = scmp.eq.s32.totalorder %s28, 1
      %p84 = por %p82, %p83
      %p86 = scmp.ne.s32.totalorder %s71, %s85
      %p87 = scmp.eq.s32.totalorder %s28, 0
      %p88 = por %p86, %p87
      %s90 = sadd.s32 %s89, 1
      %p93 = scmp.eq.s32.totalorder %s22, 1
      %p94 = scmp.ne.s32.totalorder %s89, %s91
      %p95 = scmp.eq.s32.totalorder %s22, 0
      %p96 = por %p94, %p95
      %p97 = scmp.ne.s32.totalorder %s89, %s91
      %p98 = scmp.eq.s32.totalorder %s27, 1
      %p99 = por %p97, %p98
      %p100 = scmp.ne.s32.totalorder %s91, %s92
      %p101 = scmp.eq.s32.totalorder %s27, 0
      %p102 = por %p100, %p101
      %p103 = scmp.ne.s32.totalorder %s91, %s92
      %p104 = scmp.eq.s32.totalorder %s28, 1
      %p105 = por %p103, %p104
      %p107 = scmp.ne.s32.totalorder %s92, %s106
      %p108 = scmp.eq.s32.totalorder %s28, 0
      %p109 = por %p107, %p108
      %s111 = sadd.s32 %s110, 1
      %p114 = scmp.eq.s32.totalorder %s22, 1
      %p115 = scmp.ne.s32.totalorder %s110, %s112
      %p116 = scmp.eq.s32.totalorder %s22, 0
      %p117 = por %p115, %p116
      %p118 = scmp.ne.s32.totalorder %s110, %s112
      %p119 = scmp.eq.s32.totalorder %s27, 1
      %p120 = por %p118, %p119
      %p121 = scmp.ne.s32.totalorder %s112, %s113
      %p122 = scmp.eq.s32.totalorder %s27, 0
      %p123 = por %p121, %p122
      %p124 = scmp.ne.s32.totalorder %s112, %s113
      %p125 = scmp.eq.s32.totalorder %s28, 1
      %p126 = por %p124, %p125
      %p128 = scmp.ne.s32.totalorder %s113, %s127
      %p129 = scmp.eq.s32.totalorder %s28, 0
      %p130 = por %p128, %p129
      %s132 = sadd.s32 %s131, 1
      %p135 = scmp.eq.s32.totalorder %s22, 1
      %p136 = scmp.ne.s32.totalorder %s131, %s133
      %p137 = scmp.eq.s32.totalorder %s22, 0
      %p138 = por %p136, %p137
      %p139 = scmp.ne.s32.totalorder %s131, %s133
      %p140 = scmp.eq.s32.totalorder %s27, 1
      %p141 = por %p139, %p140
      %p142 = scmp.ne.s32.totalorder %s133, %s134
      %p143 = scmp.eq.s32.totalorder %s27, 0
      %p144 = por %p142, %p143
      %p145 = scmp.ne.s32.totalorder %s133, %s134
      %p146 = scmp.eq.s32.totalorder %s28, 1
      %p147 = por %p145, %p146
      %p149 = scmp.ne.s32.totalorder %s134, %s148
      %p150 = scmp.eq.s32.totalorder %s28, 0
      %p151 = por %p149, %p150
      %s153 = sadd.s32 %s152, 1
      %p156 = scmp.eq.s32.totalorder %s22, 1
      %p157 = scmp.ne.s32.totalorder %s152, %s154
      %p158 = scmp.eq.s32.totalorder %s22, 0
      %p159 = por %p157, %p158
      %p160 = scmp.ne.s32.totalorder %s152, %s154
      %p161 = scmp.eq.s32.totalorder %s27, 1
      %p162 = por %p160, %p161
      %p163 = scmp.ne.s32.totalorder %s154, %s155
      %p164 = scmp.eq.s32.totalorder %s27, 0
      %p165 = por %p163, %p164
      %p166 = scmp.ne.s32.totalorder %s154, %s155
      %p167 = scmp.eq.s32.totalorder %s28, 1
      %p168 = por %p166, %p167
      %p170 = scmp.ne.s32.totalorder %s155, %s169
      %p171 = scmp.eq.s32.totalorder %s28, 0
      %p172 = por %p170, %p171
      %s174 = sadd.s32 %s173, 1
      %p177 = scmp.eq.s32.totalorder %s22, 1
      %p178 = scmp.ne.s32.totalorder %s173, %s175
      %p179 = scmp.eq.s32.totalorder %s22, 0
      %p180 = por %p178, %p179
      %p181 = scmp.ne.s32.totalorder %s173, %s175
      %p182 = scmp.eq.s32.totalorder %s27, 1
      %p183 = por %p181, %p182
      %p184 = scmp.ne.s32.totalorder %s175, %s176
      %p185 = scmp.eq.s32.totalorder %s27, 0
      %p186 = por %p184, %p185
      %p187 = scmp.ne.s32.totalorder %s175, %s176
      %p188 = scmp.eq.s32.totalorder %s28, 1
      %p189 = por %p187, %p188
      %p191 = scmp.ne.s32.totalorder %s176, %s190
      %p192 = scmp.eq.s32.totalorder %s28, 0
      %p193 = por %p191, %p192
      %s195 = sadd.s32 %s194, 1
      %p198 = scmp.eq.s32.totalorder %s22, 1
      %p199 = scmp.ne.s32.totalorder %s194, %s196
      %p200 = scmp.eq.s32.totalorder %s22, 0
      %p201 = por %p199, %p200
      %p202 = scmp.ne.s32.totalorder %s194, %s196
      %p203 = scmp.eq.s32.totalorder %s27, 1
      %p204 = por %p202, %p203
      %p205 = scmp.ne.s32.totalorder %s196, %s197
      %p206 = scmp.eq.s32.totalorder %s27, 0
      %p207 = por %p205, %p206
      %p208 = scmp.ne.s32.totalorder %s196, %s197
      %p209 = scmp.eq.s32.totalorder %s28, 1
      %p210 = por %p208, %p209
      %p212 = scmp.ne.s32.totalorder %s197, %s211
      %p213 = scmp.eq.s32.totalorder %s28, 0
      %p214 = por %p212, %p213
      %s216 = sadd.s32 %s215, 1
      %p219 = scmp.eq.s32.totalorder %s22, 1
      %p220 = scmp.ne.s32.totalorder %s215, %s217
      %p221 = scmp.eq.s32.totalorder %s22, 0
      %p222 = por %p220, %p221
      %p223 = scmp.ne.s32.totalorder %s215, %s217
      %p224 = scmp.eq.s32.totalorder %s27, 1
      %p225 = por %p223, %p224
      %p226 = scmp.ne.s32.totalorder %s217, %s218
      %p227 = scmp.eq.s32.totalorder %s27, 0
      %p228 = por %p226, %p227
      %p229 = scmp.ne.s32.totalorder %s217, %s218
      %p230 = scmp.eq.s32.totalorder %s28, 1
      %p231 = por %p229, %p230
      %p233 = scmp.ne.s32.totalorder %s218, %s232
      %p234 = scmp.eq.s32.totalorder %s28, 0
      %p235 = por %p233, %p234
      %s236 = ssub.s32 %s30, %s37
      %p237 = scmp.eq.s32.totalorder %s236, 0
      %s239 = sadd.s32 %s238, 1
      %s240 = scalar_select %p237, %s238, %s239
      %p243 = pneg %p237
      %p244 = scmp.eq.s32.totalorder %s22, 1
      %p245 = por %p243, %p244
      %p246 = scmp.ne.s32.totalorder %s238, %s241
      %p247 = scmp.eq.s32.totalorder %s22, 0
      %p248 = por %p246, %p247
      %p249 = scmp.ne.s32.totalorder %s238, %s241
      %p250 = scmp.eq.s32.totalorder %s27, 1
      %p251 = por %p249, %p250
      %p252 = scmp.ne.s32.totalorder %s241, %s242
      %p253 = scmp.eq.s32.totalorder %s27, 0
      %p254 = por %p252, %p253
      %p255 = scmp.ne.s32.totalorder %s241, %s242
      %p256 = scmp.eq.s32.totalorder %s28, 1
      %p257 = por %p255, %p256
      %p259 = scmp.ne.s32.totalorder %s242, %s258
      %p260 = scmp.eq.s32.totalorder %s28, 0
      %p261 = por %p259, %p260
      %s262 = ssub.s32 %s30, %s37
      %p263 = scmp.eq.s32.totalorder %s262, 0
      %s265 = sadd.s32 %s264, 1
      %s266 = scalar_select %p263, %s264, %s265
      %p269 = pneg %p263
      %p270 = scmp.eq.s32.totalorder %s22, 1
      %p271 = por %p269, %p270
      %p272 = scmp.ne.s32.totalorder %s264, %s267
      %p273 = scmp.eq.s32.totalorder %s22, 0
      %p274 = por %p272, %p273
      %p275 = scmp.ne.s32.totalorder %s264, %s267
      %p276 = scmp.eq.s32.totalorder %s27, 1
      %p277 = por %p275, %p276
      %p278 = scmp.ne.s32.totalorder %s267, %s268
      %p279 = scmp.eq.s32.totalorder %s27, 0
      %p280 = por %p278, %p279
      %p281 = scmp.ne.s32.totalorder %s267, %s268
      %p282 = scmp.eq.s32.totalorder %s28, 1
      %p283 = por %p281, %p282
      %p285 = scmp.ne.s32.totalorder %s268, %s284
      %p286 = scmp.eq.s32.totalorder %s28, 0
      %p287 = por %p285, %p286
      %s288 = ssub.s32 %s30, %s37
      %p289 = scmp.eq.s32.totalorder %s288, 0
      %s291 = sadd.s32 %s290, 1
      %s292 = scalar_select %p289, %s290, %s291
      %p295 = pneg %p289
      %p296 = scmp.eq.s32.totalorder %s22, 1
      %p297 = por %p295, %p296
      %p298 = scmp.ne.s32.totalorder %s290, %s293
      %p299 = scmp.eq.s32.totalorder %s22, 0
      %p300 = por %p298, %p299
      %p301 = scmp.ne.s32.totalorder %s290, %s293
      %p302 = scmp.eq.s32.totalorder %s27, 1
      %p303 = por %p301, %p302
      %p304 = scmp.ne.s32.totalorder %s293, %s294
      %p305 = scmp.eq.s32.totalorder %s27, 0
      %p306 = por %p304, %p305
      %p307 = scmp.ne.s32.totalorder %s293, %s294
      %p308 = scmp.eq.s32.totalorder %s28, 1
      %p309 = por %p307, %p308
      %p311 = scmp.ne.s32.totalorder %s294, %s310
      %p312 = scmp.eq.s32.totalorder %s28, 0
      %p313 = por %p311, %p312
      %s315 = sadd.s32 %s314, 1
      %p318 = scmp.eq.s32.totalorder %s22, 1
      %p319 = scmp.ne.s32.totalorder %s314, %s316
      %p320 = scmp.eq.s32.totalorder %s22, 0
      %p321 = por %p319, %p320
      %p322 = scmp.ne.s32.totalorder %s314, %s316
      %p323 = scmp.eq.s32.totalorder %s27, 1
      %p324 = por %p322, %p323
      %p325 = scmp.ne.s32.totalorder %s316, %s317
      %p326 = scmp.eq.s32.totalorder %s27, 0
      %p327 = por %p325, %p326
      %p328 = scmp.ne.s32.totalorder %s316, %s317
      %p329 = scmp.eq.s32.totalorder %s28, 1
      %p330 = por %p328, %p329
      %p332 = scmp.ne.s32.totalorder %s317, %s331
      %p333 = scmp.eq.s32.totalorder %s28, 0
      %p334 = por %p332, %p333
      %s335 = ssub.s32 %s29, %s41
      %p336 = scmp.eq.s32.totalorder %s335, 0
      %s338 = sadd.s32 %s337, 1
      %s339 = scalar_select %p336, %s337, %s338
      %p342 = pneg %p336
      %p343 = scmp.eq.s32.totalorder %s22, 1
      %p344 = por %p342, %p343
      %p345 = scmp.ne.s32.totalorder %s337, %s340
      %p346 = scmp.eq.s32.totalorder %s22, 0
      %p347 = por %p345, %p346
      %p348 = scmp.ne.s32.totalorder %s337, %s340
      %p349 = scmp.eq.s32.totalorder %s27, 1
      %p350 = por %p348, %p349
      %p351 = scmp.ne.s32.totalorder %s340, %s341
      %p352 = scmp.eq.s32.totalorder %s27, 0
      %p353 = por %p351, %p352
      %p354 = scmp.ne.s32.totalorder %s340, %s341
      %p355 = scmp.eq.s32.totalorder %s28, 1
      %p356 = por %p354, %p355
      %p358 = scmp.ne.s32.totalorder %s341, %s357
      %p359 = scmp.eq.s32.totalorder %s28, 0
      %p360 = por %p358, %p359
      %p361 = scmp.le.s32.totalorder 1, %s22
      %p362 = scmp.lt.s32.totalorder %s22, 3
      %p363 = pnand %p361, %p362
      %p364 = pneg %p363
      // Predicated region
      $region9: #{tpu_custom_call.1} parent=5 // pred_check
        _
      $region10: #{tpu_custom_call.1} parent=5 // pred_check_branch
        %366 = sbr.rel (%p363) target = $region12
      $region11: #{tpu_custom_call.1} parent=5 // pred_region
        %s367 = ssub.s32 %s22, 1
        // Predicated region
        $region13: #{tpu_custom_call.1} parent=11 // pred_check
          %p368 = pneg %p81
        $region14: #{tpu_custom_call.1} parent=11 // pred_check_branch
          %370 = sbr.rel (%p368) target = $region16
        $region15: #{tpu_custom_call.1} parent=11 // pred_region
          _
        $region16: #{tpu_custom_call.1} parent=11 // pred_fallthru
          _
        // Predicated region
        $region17: #{tpu_custom_call.1} parent=11 // pred_check
          %p371 = pneg %p102
        $region18: #{tpu_custom_call.1} parent=11 // pred_check_branch
          %373 = sbr.rel (%p371) target = $region20
        $region19: #{tpu_custom_call.1} parent=11 // pred_region
          _
        $region20: #{tpu_custom_call.1} parent=11 // pred_fallthru
          _
        // Predicated region
        $region21: #{tpu_custom_call.1} parent=11 // pred_check
          %p374 = pneg %p123
        $region22: #{tpu_custom_call.1} parent=11 // pred_check_branch
          %376 = sbr.rel (%p374) target = $region24
        $region23: #{tpu_custom_call.1} parent=11 // pred_region
          _
        $region24: #{tpu_custom_call.1} parent=11 // pred_fallthru
          _
        // Predicated region
        $region25: #{tpu_custom_call.1} parent=11 // pred_check
          %p377 = pneg %p144
        $region26: #{tpu_custom_call.1} parent=11 // pred_check_branch
          %379 = sbr.rel (%p377) target = $region28
        $region27: #{tpu_custom_call.1} parent=11 // pred_region
          _
        $region28: #{tpu_custom_call.1} parent=11 // pred_fallthru
          _
        // Predicated region
        $region29: #{tpu_custom_call.1} parent=11 // pred_check
          %p380 = pneg %p165
        $region30: #{tpu_custom_call.1} parent=11 // pred_check_branch
          %382 = sbr.rel (%p380) target = $region32
        $region31: #{tpu_custom_call.1} parent=11 // pred_region
          _
        $region32: #{tpu_custom_call.1} parent=11 // pred_fallthru
          _
        // Predicated region
        $region33: #{tpu_custom_call.1} parent=11 // pred_check
          %p383 = pneg %p186
        $region34: #{tpu_custom_call.1} parent=11 // pred_check_branch
          %385 = sbr.rel (%p383) target = $region36
        $region35: #{tpu_custom_call.1} parent=11 // pred_region
          _
        $region36: #{tpu_custom_call.1} parent=11 // pred_fallthru
          _
        // Predicated region
        $region37: #{tpu_custom_call.1} parent=11 // pred_check
          %p386 = pneg %p207
        $region38: #{tpu_custom_call.1} parent=11 // pred_check_branch
          %388 = sbr.rel (%p386) target = $region40
        $region39: #{tpu_custom_call.1} parent=11 // pred_region
          _
        $region40: #{tpu_custom_call.1} parent=11 // pred_fallthru
          _
        // Predicated region
        $region41: #{tpu_custom_call.1} parent=11 // pred_check
          %p389 = pneg %p228
        $region42: #{tpu_custom_call.1} parent=11 // pred_check_branch
          %391 = sbr.rel (%p389) target = $region44
        $region43: #{tpu_custom_call.1} parent=11 // pred_region
          _
        $region44: #{tpu_custom_call.1} parent=11 // pred_fallthru
          _
        // Predicated region
        $region45: #{tpu_custom_call.1} parent=11 // pred_check
          %p392 = pneg %p254
        $region46: #{tpu_custom_call.1} parent=11 // pred_check_branch
          %394 = sbr.rel (%p392) target = $region48
        $region47: #{tpu_custom_call.1} parent=11 // pred_region
          %p395 = scmp.lt.s32.totalorder %s32, 0
          %s396 = scalar_select %p395, %s32, 0
          %s397 = smul.addr %s396, 4
          %s398 = scalar_lea.vmem %s9, %s397
        $region48: #{tpu_custom_call.1} parent=11 // pred_fallthru
          _
        // Predicated region
        $region49: #{tpu_custom_call.1} parent=11 // pred_check
          %p399 = pneg %p280
        $region50: #{tpu_custom_call.1} parent=11 // pred_check_branch
          %401 = sbr.rel (%p399) target = $region52
        $region51: #{tpu_custom_call.1} parent=11 // pred_region
          %p402 = scmp.lt.s32.totalorder %s32, 0
          %s403 = scalar_select %p402, %s32, 0
          %s404 = scalar_lea.vmem %s10, %s403
        $region52: #{tpu_custom_call.1} parent=11 // pred_fallthru
          _
        // Predicated region
        $region53: #{tpu_custom_call.1} parent=11 // pred_check
          %p405 = pneg %p306
        $region54: #{tpu_custom_call.1} parent=11 // pred_check_branch
          %407 = sbr.rel (%p405) target = $region56
        $region55: #{tpu_custom_call.1} parent=11 // pred_region
          %s408 = smul.u32 16, %s32
          %p409 = scmp.lt.s32.totalorder %s408, 15
          %s410 = scalar_select %p409, %s408, 15
          %s411 = smul.addr %s410, 4
          %s412 = scalar_lea.vmem %s11, %s411
          %s413 = smul.u32 16, %s32
        $region56: #{tpu_custom_call.1} parent=11 // pred_fallthru
          _
        // Predicated region
        $region57: #{tpu_custom_call.1} parent=11 // pred_check
          %p414 = pneg %p327
        $region58: #{tpu_custom_call.1} parent=11 // pred_check_branch
          %416 = sbr.rel (%p414) target = $region60
        $region59: #{tpu_custom_call.1} parent=11 // pred_region
          _
        $region60: #{tpu_custom_call.1} parent=11 // pred_fallthru
          _
      $region12: #{tpu_custom_call.1} parent=5 // pred_fallthru
        _
      %p417 = scmp.lt.s32.totalorder %s22, 2
      // Predicated region
      $region61: #{tpu_custom_call.1} parent=5 // pred_check
        %p418 = pneg %p417
      $region62: #{tpu_custom_call.1} parent=5 // pred_check_branch
        %420 = sbr.rel (%p418) target = $region64
      $region63: #{tpu_custom_call.1} parent=5 // pred_region
        // Predicated region
        $region65: #{tpu_custom_call.1} parent=63 // pred_check
          %p421 = pneg %p54
        $region66: #{tpu_custom_call.1} parent=63 // pred_check_branch
          %423 = sbr.rel (%p421) target = $region68
        $region67: #{tpu_custom_call.1} parent=63 // pred_region
          %p424 = scmp.lt.s32.totalorder %s29, 1
          %s425 = scalar_select %p424, %s29, 1
          %s426 = smul.addr %s425, 8
          %s427 = scalar_lea.vmem %s0, %s426
        $region68: #{tpu_custom_call.1} parent=63 // pred_fallthru
          _
      $region64: #{tpu_custom_call.1} parent=5 // pred_fallthru
        _
      %p428 = scmp.le.s32.totalorder 1, %s22
      %p429 = scmp.lt.s32.totalorder %s22, 3
      %p430 = pnand %p428, %p429
      %p431 = pneg %p430
      // Predicated region
      $region69: #{tpu_custom_call.1} parent=5 // pred_check
        _
      $region70: #{tpu_custom_call.1} parent=5 // pred_check_branch
        %433 = sbr.rel (%p430) target = $region72
      $region71: #{tpu_custom_call.1} parent=5 // pred_region
        %s434 = ssub.s32 %s22, 1
        %p435 = scmp.lt.s32.totalorder %s31, 1
        %s436 = scalar_select %p435, %s31, 1
        %s437 = smul.addr %s436, 8
        %s438 = scalar_lea.vmem %s0, %s437
        %p439 = pneg %p60
        %p440 = pneg %p57
        %p441 = pneg %p81
        %p442 = pneg %p78
        %p443 = pneg %p102
        %p444 = pneg %p99
        %p445 = pneg %p123
        %p446 = pneg %p120
        %p447 = pneg %p144
        %p448 = pneg %p141
        %p449 = pneg %p165
        %p450 = pneg %p162
        %p451 = pneg %p186
        %p452 = pneg %p183
        %p453 = pneg %p207
        %p454 = pneg %p204
        %p455 = pneg %p228
        %p456 = pneg %p225
        %p457 = scmp.lt.s32.totalorder %s32, 0
        %s458 = scalar_select %p457, %s32, 0
        %s459 = smul.addr %s458, 4
        %s460 = scalar_lea.vmem %s9, %s459
        %p461 = pneg %p254
        %p462 = pneg %p251
        %p463 = scmp.lt.s32.totalorder %s32, 0
        %s464 = scalar_select %p463, %s32, 0
        %s465 = scalar_lea.vmem %s10, %s464
        %p466 = pneg %p280
        %p467 = pneg %p277
        %s468 = smul.u32 16, %s32
        %p469 = scmp.lt.s32.totalorder %s468, 15
        %s470 = scalar_select %p469, %s468, 15
        %s471 = smul.addr %s470, 4
        %s472 = scalar_lea.vmem %s11, %s471
        %p473 = pneg %p306
        %p474 = pneg %p303
        %p475 = pneg %p327
        %p476 = pneg %p324
        %p477 = pneg %p353
        %p478 = pneg %p350
        %s479 = sand.u32 %s340, 1
        %s480 = scalar_lea.sflag [#allocation5], %s479
        %s481 = sand.u32 %s340, 1
        %s482 = smul.addr %s481, 8
        %s483 = scalar_lea.vmem [#allocation4], %s482
        %p484 = scmp.lt.s32.totalorder %s31, 1
        %s485 = scalar_select %p484, %s31, 1
        %s486 = smul.addr %s485, 8
        %s487 = scalar_lea.vmem %s0, %s486
        %p488 = scmp.lt.s32.totalorder %s32, 0
        %s489 = scalar_select %p488, %s32, 0
        %s490 = smul.addr %s489, 4
        %s491 = scalar_lea.vmem %s9, %s490
        %p492 = scmp.lt.s32.totalorder %s32, 0
        %s493 = scalar_select %p492, %s32, 0
        %s494 = scalar_lea.vmem %s10, %s493
        %s495 = smul.u32 16, %s32
        %p496 = scmp.lt.s32.totalorder %s495, 15
        %s497 = scalar_select %p496, %s495, 15
        %s498 = smul.addr %s497, 4
        %s499 = scalar_lea.vmem %s11, %s498
        %s500 = smul.u32 16, %s32
        %p502 = scmp.eq.s32.totalorder %s32, 0
        // Predicated region
        $region73: #{tpu_custom_call.1} parent=71 // pred_check
          %p503 = pneg %p502
        $region74: #{tpu_custom_call.1} parent=71 // pred_check_branch
          %505 = sbr.rel (%p503) target = $region76
        $region75: #{tpu_custom_call.1} parent=71 // pred_region
          %v506 = vld [vmem:[%s487] sm:$0xff]
          %v507 = vld [vmem:[%s1] sm:$0x1]
          %v508 = vld [vmem:[%s2] sm:$0x1]
          %vm509 = vcmask 261120
          %v510 = vsel %vm509, %v506, 0.0
          %511 = vadd.xlane.f32.xlu0 %v510
          %v512 = vpop.xlane.xlu0 %511
          %v513 = vrcp.pop 32.0
          %v514 = vmul.f32 %v512, %v513
          %v515 = vsub.f32 %v506, %v514
          %v516 = vmul.f32 %v515, %v515
          %v517 = vsel %vm509, %v516, 0.0
          %518 = vadd.xlane.f32.xlu0 %v517
          %v519 = vpop.xlane.xlu0 %518
          %v520 = vmul.f32 %v519, %v513
          %v521 = vadd.f32 %v520, 1e-05
          %v522 = vrsqrt.pop %v521
          %v523 = vmul.f32 %v515, %v522
          %v525 = vlaneseq
          %v526 = vshrl.u32 %v525, 7
          %v527 = vsub.s32 0, %v526
          %v528 = vrot.slane %v507, %v527
          %v530 = vmul.f32 %v523, %v528
          %v532 = vlaneseq
          %v533 = vshrl.u32 %v532, 7
          %v534 = vsub.s32 0, %v533
          %v535 = vrot.slane %v508, %v534
          %v537 = vadd.f32 %v530, %v535
          %v538 = vpack.c.bf16 %v537, %v537
          %v539 = vld [vmem:[%s3] sm:$0xf]
          %v540 = vld [vmem:[%s3 + $0x4] sm:$0xf]
          %v541 = vld [vmem:[%s3 + $0x8] sm:$0xf]
          %v542 = vld [vmem:[%s3 + $0xc] sm:$0xf]
          %v543 = vld [vmem:[%s4] sm:$0x1]
          %v545 = vlaneseq
          %v546 = vshrl.u32 %v545, 7
          %v547 = vsub.s32 0, %v546
          %v548 = vrot.slane %v543, %v547
          %v554 = vunpack.c.l.b16 %v539
          %v555 = vunpack.c.l.b16 %v540
          %v556 = vunpack.c.l.b16 %v541
          %v557 = vunpack.c.l.b16 %v542
          %v558 = vpack.c.b16 %v555, %v554
          %v559 = vpack.c.b16 %v557, %v556
          %v563 = vsel %vm509, %v538, 0
          %565 = vmatprep.subr.bf16.mxu0 0
          %566 = vmatpush1.bf16.msra.mxu0 %v558
          %567 = vmatprep.subr.bf16.mxu0 0
          %568 = vmatpush1.bf16.msra.mxu0 %v559
          %569 = vmatprep.subr.bf16.mxu0 0
          %570 = vmatpush1.bf16.msra.mxu0 0
          %571 = vmatprep.subr.bf16.mxu0 0
          %572 = vmatpush1.bf16.msra.mxu0 0
          %573 = vmatprep.subr.bf16.mxu0 0
          %574 = vmatpush1.bf16.msra.mxu0 0
          %575 = vmatprep.subr.bf16.mxu0 0
          %576 = vmatpush1.bf16.msra.mxu0 0
          %577 = vmatprep.subr.bf16.mxu0 0
          %578 = vmatpush1.bf16.msra.mxu0 0
          %579 = vmatprep.subr.bf16.mxu0 0
          %580 = vmatpush1.bf16.msra.mxu0 0
          %581 = vmatprep.subr.bf16.mxu0 0
          %582 = vmatpush1.bf16.msra.mxu0 0
          %583 = vmatprep.subr.bf16.mxu0 0
          %584 = vmatpush1.bf16.msra.mxu0 0
          %585 = vmatprep.subr.bf16.mxu0 0
          %586 = vmatpush1.bf16.msra.mxu0 0
          %587 = vmatprep.subr.bf16.mxu0 0
          %588 = vmatpush1.bf16.msra.mxu0 0
          %589 = vmatprep.subr.bf16.mxu0 0
          %590 = vmatpush1.bf16.msra.mxu0 0
          %591 = vmatprep.subr.bf16.mxu0 0
          %592 = vmatpush1.bf16.msra.mxu0 0
          %593 = vmatprep.subr.bf16.mxu0 0
          %594 = vmatpush1.bf16.msra.mxu0 0
          %595 = vmatprep.subr.bf16.mxu0 0
          %596 = vmatpush1.bf16.msra.mxu0 0
          %597 = vmatprep.mubr.bf16.mxu0 0
          %598 = vmatmul.mubr.bf16.gmra.mrb[0].mxu0 %v563
          %v599 = vpop.f32.mrb[0].mxu0
          %v600 = vadd.f32 %v548, %v599
          %v601 = vpop.f32.mrb[0].mxu0
          %v602 = vpop.f32.mrb[0].mxu0
          %v603 = vpop.f32.mrb[0].mxu0
          %604 = vdwg.mxu0
          %v605 = vmul.f32 %v600, 0.35355338
          %v606 = vpack.c.bf16 %v605, %v605
          %v607 = vpack.c.bf16 %v600, %v600
          %609 = vrot.lane.b32.xlu0 %v606, 120
          %v610 = vpop.permute.xlu0 %609
          %611 = vrot.lane.b32.xlu0 %v606, 112
          %v612 = vpop.permute.xlu0 %611
          %613 = vrot.lane.b32.xlu0 %v606, 104
          %v614 = vpop.permute.xlu0 %613
          %616 = vrot.lane.b32.xlu0 %v607, 120
          %v617 = vpop.permute.xlu0 %616
          %618 = vrot.lane.b32.xlu0 %v607, 112
          %v619 = vpop.permute.xlu0 %618
          %620 = vrot.lane.b32.xlu0 %v607, 104
          %v621 = vpop.permute.xlu0 %620
          %622 = vrot.lane.b32.xlu0 %v607, 96
          %v623 = vpop.permute.xlu0 %622
          %vm624 = vcmask 64512
          %v626 = vsel %vm624, %v606, 0
          %v629 = vsel %vm624, %v623, 0
          %631 = vmatprep.subr.bf16.mxu0 0
          %632 = vmatpush1.bf16.xpose.msra.mxu0 %v629
          %633 = vmatprep.subr.bf16.mxu0 0
          %634 = vmatpush1.bf16.xpose.msra.mxu0 0
          %635 = vmatprep.subr.bf16.mxu0 0
          %636 = vmatpush1.bf16.xpose.msra.mxu0 0
          %637 = vmatprep.subr.bf16.mxu0 0
          %638 = vmatpush1.bf16.xpose.msra.mxu0 0
          %639 = vmatprep.subr.bf16.mxu0 0
          %640 = vmatpush1.bf16.xpose.msra.mxu0 0
          %641 = vmatprep.subr.bf16.mxu0 0
          %642 = vmatpush1.bf16.xpose.msra.mxu0 0
          %643 = vmatprep.subr.bf16.mxu0 0
          %644 = vmatpush1.bf16.xpose.msra.mxu0 0
          %645 = vmatprep.subr.bf16.mxu0 0
          %646 = vmatpush1.bf16.xpose.msra.mxu0 0
          %647 = vmatprep.subr.bf16.mxu0 0
          %648 = vmatpush1.bf16.xpose.msra.mxu0 0
          %649 = vmatprep.subr.bf16.mxu0 0
          %650 = vmatpush1.bf16.xpose.msra.mxu0 0
          %651 = vmatprep.subr.bf16.mxu0 0
          %652 = vmatpush1.bf16.xpose.msra.mxu0 0
          %653 = vmatprep.subr.bf16.mxu0 0
          %654 = vmatpush1.bf16.xpose.msra.mxu0 0
          %655 = vmatprep.subr.bf16.mxu0 0
          %656 = vmatpush1.bf16.xpose.msra.mxu0 0
          %657 = vmatprep.subr.bf16.mxu0 0
          %658 = vmatpush1.bf16.xpose.msra.mxu0 0
          %659 = vmatprep.subr.bf16.mxu0 0
          %660 = vmatpush1.bf16.xpose.msra.mxu0 0
          %661 = vmatprep.subr.bf16.mxu0 0
          %662 = vmatpush1.bf16.xpose.msra.mxu0 0
          %663 = vmatprep.mubr.bf16.mxu0 0
          %664 = vmatmul.mubr.bf16.gmra.mrb[0].mxu0 %v626
          %v665 = vpop.f32.mrb[0].mxu0
          %v666 = vadd.f32 0.0, %v665
          %v667 = vpop.f32.mrb[0].mxu0
          %v668 = vpop.f32.mrb[0].mxu0
          %v669 = vpop.f32.mrb[0].mxu0
          %670 = vdwg.mxu0
          %671 = vrot.lane.b32.xlu0 %v617, 96
          %v672 = vpop.permute.xlu0 %671
          %v674 = vsel %vm624, %v610, 0
          %v677 = vsel %vm624, %v672, 0
          %679 = vmatprep.subr.bf16.mxu0 0
          %680 = vmatpush1.bf16.xpose.msra.mxu0 %v677
          %681 = vmatprep.subr.bf16.mxu0 0
          %682 = vmatpush1.bf16.xpose.msra.mxu0 0
          %683 = vmatprep.subr.bf16.mxu0 0
          %684 = vmatpush1.bf16.xpose.msra.mxu0 0
          %685 = vmatprep.subr.bf16.mxu0 0
          %686 = vmatpush1.bf16.xpose.msra.mxu0 0
          %687 = vmatprep.subr.bf16.mxu0 0
          %688 = vmatpush1.bf16.xpose.msra.mxu0 0
          %689 = vmatprep.subr.bf16.mxu0 0
          %690 = vmatpush1.bf16.xpose.msra.mxu0 0
          %691 = vmatprep.subr.bf16.mxu0 0
          %692 = vmatpush1.bf16.xpose.msra.mxu0 0
          %693 = vmatprep.subr.bf16.mxu0 0
          %694 = vmatpush1.bf16.xpose.msra.mxu0 0
          %695 = vmatprep.subr.bf16.mxu0 0
          %696 = vmatpush1.bf16.xpose.msra.mxu0 0
          %697 = vmatprep.subr.bf16.mxu0 0
          %698 = vmatpush1.bf16.xpose.msra.mxu0 0
          %699 = vmatprep.subr.bf16.mxu0 0
          %700 = vmatpush1.bf16.xpose.msra.mxu0 0
          %701 = vmatprep.subr.bf16.mxu0 0
          %702 = vmatpush1.bf16.xpose.msra.mxu0 0
          %703 = vmatprep.subr.bf16.mxu0 0
          %704 = vmatpush1.bf16.xpose.msra.mxu0 0
          %705 = vmatprep.subr.bf16.mxu0 0
          %706 = vmatpush1.bf16.xpose.msra.mxu0 0
          %707 = vmatprep.subr.bf16.mxu0 0
          %708 = vmatpush1.bf16.xpose.msra.mxu0 0
          %709 = vmatprep.subr.bf16.mxu0 0
          %710 = vmatpush1.bf16.xpose.msra.mxu0 0
          %711 = vmatprep.mubr.bf16.mxu0 0
          %712 = vmatmul.mubr.bf16.gmra.mrb[0].mxu0 %v674
          %v713 = vpop.f32.mrb[0].mxu0
          %v714 = vadd.f32 0.0, %v713
          %v715 = vpop.f32.mrb[0].mxu0
          %v716 = vpop.f32.mrb[0].mxu0
          %v717 = vpop.f32.mrb[0].mxu0
          %718 = vdwg.mxu0
          %719 = vrot.lane.b32.xlu0 %v619, 96
          %v720 = vpop.permute.xlu0 %719
          %v722 = vsel %vm624, %v612, 0
          %v725 = vsel %vm624, %v720, 0
          %727 = vmatprep.subr.bf16.mxu0 0
          %728 = vmatpush1.bf16.xpose.msra.mxu0 %v725
          %729 = vmatprep.subr.bf16.mxu0 0
          %730 = vmatpush1.bf16.xpose.msra.mxu0 0
          %731 = vmatprep.subr.bf16.mxu0 0
          %732 = vmatpush1.bf16.xpose.msra.mxu0 0
          %733 = vmatprep.subr.bf16.mxu0 0
          %734 = vmatpush1.bf16.xpose.msra.mxu0 0
          %735 = vmatprep.subr.bf16.mxu0 0
          %736 = vmatpush1.bf16.xpose.msra.mxu0 0
          %737 = vmatprep.subr.bf16.mxu0 0
          %738 = vmatpush1.bf16.xpose.msra.mxu0 0
          %739 = vmatprep.subr.bf16.mxu0 0
          %740 = vmatpush1.bf16.xpose.msra.mxu0 0
          %741 = vmatprep.subr.bf16.mxu0 0
          %742 = vmatpush1.bf16.xpose.msra.mxu0 0
          %743 = vmatprep.subr.bf16.mxu0 0
          %744 = vmatpush1.bf16.xpose.msra.mxu0 0
          %745 = vmatprep.subr.bf16.mxu0 0
          %746 = vmatpush1.bf16.xpose.msra.mxu0 0
          %747 = vmatprep.subr.bf16.mxu0 0
          %748 = vmatpush1.bf16.xpose.msra.mxu0 0
          %749 = vmatprep.subr.bf16.mxu0 0
          %750 = vmatpush1.bf16.xpose.msra.mxu0 0
          %751 = vmatprep.subr.bf16.mxu0 0
          %752 = vmatpush1.bf16.xpose.msra.mxu0 0
          %753 = vmatprep.subr.bf16.mxu0 0
          %754 = vmatpush1.bf16.xpose.msra.mxu0 0
          %755 = vmatprep.subr.bf16.mxu0 0
          %756 = vmatpush1.bf16.xpose.msra.mxu0 0
          %757 = vmatprep.subr.bf16.mxu0 0
          %758 = vmatpush1.bf16.xpose.msra.mxu0 0
          %759 = vmatprep.mubr.bf16.mxu0 0
          %760 = vmatmul.mubr.bf16.gmra.mrb[0].mxu0 %v722
          %v761 = vpop.f32.mrb[0].mxu0
          %v762 = vadd.f32 0.0, %v761
          %v763 = vpop.f32.mrb[0].mxu0
          %v764 = vpop.f32.mrb[0].mxu0
          %v765 = vpop.f32.mrb[0].mxu0
          %766 = vdwg.mxu0
          %767 = vrot.lane.b32.xlu0 %v621, 96
          %v768 = vpop.permute.xlu0 %767
          %v770 = vsel %vm624, %v614, 0
          %v773 = vsel %vm624, %v768, 0
          %775 = vmatprep.subr.bf16.mxu0 0
          %776 = vmatpush1.bf16.xpose.msra.mxu0 %v773
          %777 = vmatprep.subr.bf16.mxu0 0
          %778 = vmatpush1.bf16.xpose.msra.mxu0 0
          %779 = vmatprep.subr.bf16.mxu0 0
          %780 = vmatpush1.bf16.xpose.msra.mxu0 0
          %781 = vmatprep.subr.bf16.mxu0 0
          %782 = vmatpush1.bf16.xpose.msra.mxu0 0
          %783 = vmatprep.subr.bf16.mxu0 0
          %784 = vmatpush1.bf16.xpose.msra.mxu0 0
          %785 = vmatprep.subr.bf16.mxu0 0
          %786 = vmatpush1.bf16.xpose.msra.mxu0 0
          %787 = vmatprep.subr.bf16.mxu0 0
          %788 = vmatpush1.bf16.xpose.msra.mxu0 0
          %789 = vmatprep.subr.bf16.mxu0 0
          %790 = vmatpush1.bf16.xpose.msra.mxu0 0
          %791 = vmatprep.subr.bf16.mxu0 0
          %792 = vmatpush1.bf16.xpose.msra.mxu0 0
          %793 = vmatprep.subr.bf16.mxu0 0
          %794 = vmatpush1.bf16.xpose.msra.mxu0 0
          %795 = vmatprep.subr.bf16.mxu0 0
          %796 = vmatpush1.bf16.xpose.msra.mxu0 0
          %797 = vmatprep.subr.bf16.mxu0 0
          %798 = vmatpush1.bf16.xpose.msra.mxu0 0
          %799 = vmatprep.subr.bf16.mxu0 0
          %800 = vmatpush1.bf16.xpose.msra.mxu0 0
          %801 = vmatprep.subr.bf16.mxu0 0
          %802 = vmatpush1.bf16.xpose.msra.mxu0 0
          %803 = vmatprep.subr.bf16.mxu0 0
          %804 = vmatpush1.bf16.xpose.msra.mxu0 0
          %805 = vmatprep.subr.bf16.mxu0 0
          %806 = vmatpush1.bf16.xpose.msra.mxu0 0
          %807 = vmatprep.mubr.bf16.mxu0 0
          %808 = vmatmul.mubr.bf16.gmra.mrb[0].mxu0 %v770
          %v809 = vpop.f32.mrb[0].mxu0
          %v810 = vadd.f32 0.0, %v809
          %v811 = vpop.f32.mrb[0].mxu0
          %v812 = vpop.f32.mrb[0].mxu0
          %v813 = vpop.f32.mrb[0].mxu0
          %814 = vdwg.mxu0
          %v815 = vsel %vm624, %v666, -inf
          %816 = vmax.xlane.f32.xlu0 %v815
          %v817 = vpop.xlane.xlu0 %816
          %v818 = vsel %vm624, %v714, -inf
          %819 = vmax.xlane.f32.xlu0 %v818
          %v820 = vpop.xlane.xlu0 %819
          %v821 = vsel %vm624, %v762, -inf
          %822 = vmax.xlane.f32.xlu0 %v821
          %v823 = vpop.xlane.xlu0 %822
          %v824 = vsel %vm624, %v810, -inf
          %825 = vmax.xlane.f32.xlu0 %v824
          %v826 = vpop.xlane.xlu0 %825
          %v827 = vsub.f32 %v666, %v817
          %v828 = vsub.f32 %v714, %v820
          %v829 = vsub.f32 %v762, %v823
          %v830 = vsub.f32 %v810, %v826
          %v831 = vmul.f32 %v827, 1.442695
          %v832 = vpow.pop %v831
          %v833 = vmul.f32 %v828, 1.442695
          %v834 = vpow.pop %v833
          %v835 = vmul.f32 %v829, 1.442695
          %v836 = vpow.pop %v835
          %v837 = vmul.f32 %v830, 1.442695
          %v838 = vpow.pop %v837
          %v839 = vsel %vm624, %v832, 0.0
          %840 = vadd.xlane.f32.xlu0 %v839
          %v841 = vpop.xlane.xlu0 %840
          %v842 = vsel %vm624, %v834, 0.0
          %843 = vadd.xlane.f32.xlu0 %v842
          %v844 = vpop.xlane.xlu0 %843
          %v845 = vsel %vm624, %v836, 0.0
          %846 = vadd.xlane.f32.xlu0 %v845
          %v847 = vpop.xlane.xlu0 %846
          %v848 = vsel %vm624, %v838, 0.0
          %849 = vadd.xlane.f32.xlu0 %v848
          %v850 = vpop.xlane.xlu0 %849
          %v851 = vpack.c.bf16 %v832, %v832
          %v852 = vpack.c.bf16 %v834, %v834
          %v853 = vpack.c.bf16 %v836, %v836
          %v854 = vpack.c.bf16 %v838, %v838
          %855 = vrot.lane.b32.xlu0 %v607, 64
          %v856 = vpop.permute.xlu0 %855
          %v858 = vsel %vm624, %v851, 0
          %vm860 = vcmask 1043456
          %v862 = vsel %vm860, %v856, 0
          %864 = vmatprep.subr.bf16.mxu0 0
          %865 = vmatpush1.bf16.msra.mxu0 %v862
          %866 = vmatprep.subr.bf16.mxu0 0
          %867 = vmatpush1.bf16.msra.mxu0 0
          %868 = vmatprep.subr.bf16.mxu0 0
          %869 = vmatpush1.bf16.msra.mxu0 0
          %870 = vmatprep.subr.bf16.mxu0 0
          %871 = vmatpush1.bf16.msra.mxu0 0
          %872 = vmatprep.subr.bf16.mxu0 0
          %873 = vmatpush1.bf16.msra.mxu0 0
          %874 = vmatprep.subr.bf16.mxu0 0
          %875 = vmatpush1.bf16.msra.mxu0 0
          %876 = vmatprep.subr.bf16.mxu0 0
          %877 = vmatpush1.bf16.msra.mxu0 0
          %878 = vmatprep.subr.bf16.mxu0 0
          %879 = vmatpush1.bf16.msra.mxu0 0
          %880 = vmatprep.subr.bf16.mxu0 0
          %881 = vmatpush1.bf16.msra.mxu0 0
          %882 = vmatprep.subr.bf16.mxu0 0
          %883 = vmatpush1.bf16.msra.mxu0 0
          %884 = vmatprep.subr.bf16.mxu0 0
          %885 = vmatpush1.bf16.msra.mxu0 0
          %886 = vmatprep.subr.bf16.mxu0 0
          %887 = vmatpush1.bf16.msra.mxu0 0
          %888 = vmatprep.subr.bf16.mxu0 0
          %889 = vmatpush1.bf16.msra.mxu0 0
          %890 = vmatprep.subr.bf16.mxu0 0
          %891 = vmatpush1.bf16.msra.mxu0 0
          %892 = vmatprep.subr.bf16.mxu0 0
          %893 = vmatpush1.bf16.msra.mxu0 0
          %894 = vmatprep.subr.bf16.mxu0 0
          %895 = vmatpush1.bf16.msra.mxu0 0
          %896 = vmatprep.mubr.bf16.mxu0 0
          %897 = vmatmul.mubr.bf16.gmra.mrb[0].mxu0 %v858
          %v898 = vpop.f32.mrb[0].mxu0
          %v899 = vadd.f32 0.0, %v898
          %v900 = vpop.f32.mrb[0].mxu0
          %v901 = vpop.f32.mrb[0].mxu0
          %v902 = vpop.f32.mrb[0].mxu0
          %903 = vdwg.mxu0
          %904 = vrot.lane.b32.xlu0 %v617, 64
          %v905 = vpop.permute.xlu0 %904
          %v907 = vsel %vm624, %v852, 0
          %v910 = vsel %vm860, %v905, 0
          %912 = vmatprep.subr.bf16.mxu0 0
          %913 = vmatpush1.bf16.msra.mxu0 %v910
          %914 = vmatprep.subr.bf16.mxu0 0
          %915 = vmatpush1.bf16.msra.mxu0 0
          %916 = vmatprep.subr.bf16.mxu0 0
          %917 = vmatpush1.bf16.msra.mxu0 0
          %918 = vmatprep.subr.bf16.mxu0 0
          %919 = vmatpush1.bf16.msra.mxu0 0
          %920 = vmatprep.subr.bf16.mxu0 0
          %921 = vmatpush1.bf16.msra.mxu0 0
          %922 = vmatprep.subr.bf16.mxu0 0
          %923 = vmatpush1.bf16.msra.mxu0 0
          %924 = vmatprep.subr.bf16.mxu0 0
          %925 = vmatpush1.bf16.msra.mxu0 0
          %926 = vmatprep.subr.bf16.mxu0 0
          %927 = vmatpush1.bf16.msra.mxu0 0
          %928 = vmatprep.subr.bf16.mxu0 0
          %929 = vmatpush1.bf16.msra.mxu0 0
          %930 = vmatprep.subr.bf16.mxu0 0
          %931 = vmatpush1.bf16.msra.mxu0 0
          %932 = vmatprep.subr.bf16.mxu0 0
          %933 = vmatpush1.bf16.msra.mxu0 0
          %934 = vmatprep.subr.bf16.mxu0 0
          %935 = vmatpush1.bf16.msra.mxu0 0
          %936 = vmatprep.subr.bf16.mxu0 0
          %937 = vmatpush1.bf16.msra.mxu0 0
          %938 = vmatprep.subr.bf16.mxu0 0
          %939 = vmatpush1.bf16.msra.mxu0 0
          %940 = vmatprep.subr.bf16.mxu0 0
          %941 = vmatpush1.bf16.msra.mxu0 0
          %942 = vmatprep.subr.bf16.mxu0 0
          %943 = vmatpush1.bf16.msra.mxu0 0
          %944 = vmatprep.mubr.bf16.mxu0 0
          %945 = vmatmul.mubr.bf16.gmra.mrb[0].mxu0 %v907
          %v946 = vpop.f32.mrb[0].mxu0
          %v947 = vadd.f32 0.0, %v946
          %v948 = vpop.f32.mrb[0].mxu0
          %v949 = vpop.f32.mrb[0].mxu0
          %v950 = vpop.f32.mrb[0].mxu0
          %951 = vdwg.mxu0
          %952 = vrot.lane.b32.xlu0 %v619, 64
          %v953 = vpop.permute.xlu0 %952
          %v955 = vsel %vm624, %v853, 0
          %v958 = vsel %vm860, %v953, 0
          %960 = vmatprep.subr.bf16.mxu0 0
          %961 = vmatpush1.bf16.msra.mxu0 %v958
          %962 = vmatprep.subr.bf16.mxu0 0
          %963 = vmatpush1.bf16.msra.mxu0 0
          %964 = vmatprep.subr.bf16.mxu0 0
          %965 = vmatpush1.bf16.msra.mxu0 0
          %966 = vmatprep.subr.bf16.mxu0 0
          %967 = vmatpush1.bf16.msra.mxu0 0
          %968 = vmatprep.subr.bf16.mxu0 0
          %969 = vmatpush1.bf16.msra.mxu0 0
          %970 = vmatprep.subr.bf16.mxu0 0
          %971 = vmatpush1.bf16.msra.mxu0 0
          %972 = vmatprep.subr.bf16.mxu0 0
          %973 = vmatpush1.bf16.msra.mxu0 0
          %974 = vmatprep.subr.bf16.mxu0 0
          %975 = vmatpush1.bf16.msra.mxu0 0
          %976 = vmatprep.subr.bf16.mxu0 0
          %977 = vmatpush1.bf16.msra.mxu0 0
          %978 = vmatprep.subr.bf16.mxu0 0
          %979 = vmatpush1.bf16.msra.mxu0 0
          %980 = vmatprep.subr.bf16.mxu0 0
          %981 = vmatpush1.bf16.msra.mxu0 0
          %982 = vmatprep.subr.bf16.mxu0 0
          %983 = vmatpush1.bf16.msra.mxu0 0
          %984 = vmatprep.subr.bf16.mxu0 0
          %985 = vmatpush1.bf16.msra.mxu0 0
          %986 = vmatprep.subr.bf16.mxu0 0
          %987 = vmatpush1.bf16.msra.mxu0 0
          %988 = vmatprep.subr.bf16.mxu0 0
          %989 = vmatpush1.bf16.msra.mxu0 0
          %990 = vmatprep.subr.bf16.mxu0 0
          %991 = vmatpush1.bf16.msra.mxu0 0
          %992 = vmatprep.mubr.bf16.mxu0 0
          %993 = vmatmul.mubr.bf16.gmra.mrb[0].mxu0 %v955
          %v994 = vpop.f32.mrb[0].mxu0
          %v995 = vadd.f32 0.0, %v994
          %v996 = vpop.f32.mrb[0].mxu0
          %v997 = vpop.f32.mrb[0].mxu0
          %v998 = vpop.f32.mrb[0].mxu0
          %999 = vdwg.mxu0
          %1000 = vrot.lane.b32.xlu0 %v621, 64
          %v1001 = vpop.permute.xlu0 %1000
          %v1003 = vsel %vm624, %v854, 0
          %v1006 = vsel %vm860, %v1001, 0
          %1008 = vmatprep.subr.bf16.mxu0 0
          %1009 = vmatpush1.bf16.msra.mxu0 %v1006
          %1010 = vmatprep.subr.bf16.mxu0 0
          %1011 = vmatpush1.bf16.msra.mxu0 0
          %1012 = vmatprep.subr.bf16.mxu0 0
          %1013 = vmatpush1.bf16.msra.mxu0 0
          %1014 = vmatprep.subr.bf16.mxu0 0
          %1015 = vmatpush1.bf16.msra.mxu0 0
          %1016 = vmatprep.subr.bf16.mxu0 0
          %1017 = vmatpush1.bf16.msra.mxu0 0
          %1018 = vmatprep.subr.bf16.mxu0 0
          %1019 = vmatpush1.bf16.msra.mxu0 0
          %1020 = vmatprep.subr.bf16.mxu0 0
          %1021 = vmatpush1.bf16.msra.mxu0 0
          %1022 = vmatprep.subr.bf16.mxu0 0
          %1023 = vmatpush1.bf16.msra.mxu0 0
          %1024 = vmatprep.subr.bf16.mxu0 0
          %1025 = vmatpush1.bf16.msra.mxu0 0
          %1026 = vmatprep.subr.bf16.mxu0 0
          %1027 = vmatpush1.bf16.msra.mxu0 0
          %1028 = vmatprep.subr.bf16.mxu0 0
          %1029 = vmatpush1.bf16.msra.mxu0 0
          %1030 = vmatprep.subr.bf16.mxu0 0
          %1031 = vmatpush1.bf16.msra.mxu0 0
          %1032 = vmatprep.subr.bf16.mxu0 0
          %1033 = vmatpush1.bf16.msra.mxu0 0
          %1034 = vmatprep.subr.bf16.mxu0 0
          %1035 = vmatpush1.bf16.msra.mxu0 0
          %1036 = vmatprep.subr.bf16.mxu0 0
          %1037 = vmatpush1.bf16.msra.mxu0 0
          %1038 = vmatprep.subr.bf16.mxu0 0
          %1039 = vmatpush1.bf16.msra.mxu0 0
          %1040 = vmatprep.mubr.bf16.mxu0 0
          %1041 = vmatmul.mubr.bf16.gmra.mrb[0].mxu0 %v1003
          %v1042 = vpop.f32.mrb[0].mxu0
          %v1043 = vadd.f32 0.0, %v1042
          %v1044 = vpop.f32.mrb[0].mxu0
          %v1045 = vpop.f32.mrb[0].mxu0
          %v1046 = vpop.f32.mrb[0].mxu0
          %1047 = vdwg.mxu0
          %v1048 = vrcp.pop %v841
          %v1049 = vrcp.pop %v844
          %v1050 = vrcp.pop %v847
          %v1051 = vrcp.pop %v850
          %v1052 = vmul.f32 %v899, %v1048
          %v1053 = vmul.f32 %v947, %v1049
          %v1054 = vmul.f32 %v995, %v1050
          %v1055 = vmul.f32 %v1043, %v1051
          %v1056 = vpack.c.bf16 %v1052, %v1052
          %v1057 = vpack.c.bf16 %v1053, %v1053
          %v1058 = vpack.c.bf16 %v1054, %v1054
          %v1059 = vpack.c.bf16 %v1055, %v1055
          %1061 = vrot.lane.b32.xlu0 %v1057, 8
          %v1062 = vpop.permute.xlu0 %1061
          %1064 = vrot.lane.b32.xlu0 %v1058, 16
          %v1065 = vpop.permute.xlu0 %1064
          %1067 = vrot.lane.b32.xlu0 %v1059, 24
          %v1068 = vpop.permute.xlu0 %1067
          %v1071 = vsel %vm624, %v1056, %v1062
          %vm1072 = vcmask 130048
          %v1074 = vsel %vm1072, %v1071, %v1065
          %vm1075 = vcmask 195584
          %v1077 = vsel %vm1075, %v1074, %v1068
          %v1078 = vld [vmem:[%s5] sm:$0xf]
          %v1079 = vld [vmem:[%s5 + $0x4] sm:$0xf]
          %v1080 = vld [vmem:[%s5 + $0x8] sm:$0xf]
          %v1081 = vld [vmem:[%s5 + $0xc] sm:$0xf]
          %v1082 = vld [vmem:[%s6] sm:$0x1]
          %v1084 = vlaneseq
          %v1085 = vshrl.u32 %v1084, 7
          %v1086 = vsub.s32 0, %v1085
          %v1087 = vrot.slane %v1082, %v1086
          %v1093 = vunpack.c.l.b16 %v1078
          %v1094 = vunpack.c.l.b16 %v1079
          %v1095 = vunpack.c.l.b16 %v1080
          %v1096 = vunpack.c.l.b16 %v1081
          %v1097 = vpack.c.b16 %v1094, %v1093
          %v1098 = vpack.c.b16 %v1096, %v1095
          %v1101 = vsel %vm509, %v1077, 0
          %1103 = vmatprep.subr.bf16.mxu0 0
          %1104 = vmatpush1.bf16.msra.mxu0 %v1097
          %1105 = vmatprep.subr.bf16.mxu0 0
          %1106 = vmatpush1.bf16.msra.mxu0 %v1098
          %1107 = vmatprep.subr.bf16.mxu0 0
          %1108 = vmatpush1.bf16.msra.mxu0 0
          %1109 = vmatprep.subr.bf16.mxu0 0
          %1110 = vmatpush1.bf16.msra.mxu0 0
          %1111 = vmatprep.subr.bf16.mxu0 0
          %1112 = vmatpush1.bf16.msra.mxu0 0
          %1113 = vmatprep.subr.bf16.mxu0 0
          %1114 = vmatpush1.bf16.msra.mxu0 0
          %1115 = vmatprep.subr.bf16.mxu0 0
          %1116 = vmatpush1.bf16.msra.mxu0 0
          %1117 = vmatprep.subr.bf16.mxu0 0
          %1118 = vmatpush1.bf16.msra.mxu0 0
          %1119 = vmatprep.subr.bf16.mxu0 0
          %1120 = vmatpush1.bf16.msra.mxu0 0
          %1121 = vmatprep.subr.bf16.mxu0 0
          %1122 = vmatpush1.bf16.msra.mxu0 0
          %1123 = vmatprep.subr.bf16.mxu0 0
          %1124 = vmatpush1.bf16.msra.mxu0 0
          %1125 = vmatprep.subr.bf16.mxu0 0
          %1126 = vmatpush1.bf16.msra.mxu0 0
          %1127 = vmatprep.subr.bf16.mxu0 0
          %1128 = vmatpush1.bf16.msra.mxu0 0
          %1129 = vmatprep.subr.bf16.mxu0 0
          %1130 = vmatpush1.bf16.msra.mxu0 0
          %1131 = vmatprep.subr.bf16.mxu0 0
          %1132 = vmatpush1.bf16.msra.mxu0 0
          %1133 = vmatprep.subr.bf16.mxu0 0
          %1134 = vmatpush1.bf16.msra.mxu0 0
          %1135 = vmatprep.mubr.bf16.mxu0 0
          %1136 = vmatmul.mubr.bf16.gmra.mrb[0].mxu0 %v1101
          %v1137 = vpop.f32.mrb[0].mxu0
          %v1138 = vadd.f32 %v1087, %v1137
          %v1139 = vpop.f32.mrb[0].mxu0
          %v1140 = vpop.f32.mrb[0].mxu0
          %v1141 = vpop.f32.mrb[0].mxu0
          %1142 = vdwg.mxu0
          %v1143 = vadd.f32 %v506, %v1138
          %v1144 = vld [vmem:[%s7] sm:$0x1]
          %v1145 = vld [vmem:[%s8] sm:$0x1]
          %v1146 = vsel %vm509, %v1143, 0.0
          %1147 = vadd.xlane.f32.xlu0 %v1146
          %v1148 = vpop.xlane.xlu0 %1147
          %v1149 = vmul.f32 %v1148, %v513
          %v1150 = vsub.f32 %v1143, %v1149
          %v1151 = vmul.f32 %v1150, %v1150
          %v1152 = vsel %vm509, %v1151, 0.0
          %1153 = vadd.xlane.f32.xlu0 %v1152
          %v1154 = vpop.xlane.xlu0 %1153
          %v1155 = vmul.f32 %v1154, %v513
          %v1156 = vadd.f32 %v1155, 1e-05
          %v1157 = vrsqrt.pop %v1156
          %v1158 = vmul.f32 %v1150, %v1157
          %v1160 = vlaneseq
          %v1161 = vshrl.u32 %v1160, 7
          %v1162 = vsub.s32 0, %v1161
          %v1163 = vrot.slane %v1144, %v1162
          %v1165 = vmul.f32 %v1158, %v1163
          %v1167 = vlaneseq
          %v1168 = vshrl.u32 %v1167, 7
          %v1169 = vsub.s32 0, %v1168
          %v1170 = vrot.slane %v1145, %v1169
          %v1172 = vadd.f32 %v1165, %v1170
          %v1173 = vpack.c.bf16 %v1172, %v1172
          %vm1174 = vcmask 257024
          %1175 = vst.msk [vmem:[#allocation2] sm:$0xf] %vm1174, %v1173
          %v1176 = vld [vmem:[%s12] sm:$0x1]
          %v1178 = vlaneseq
          %v1179 = vshrl.u32 %v1178, 7
          %v1180 = vsub.s32 0, %v1179
          %v1181 = vrot.slane %v1176, %v1180
          %v1183 = vadd.f32 %v1143, %v1181
          %1184 = vst.msk [vmem:[#allocation3] sm:$0xff] %vm509, %v1183
        $region76: #{tpu_custom_call.1} parent=71 // pred_fallthru
          _
        %v1185 = vld [vmem:[#allocation2] sm:$0xf]
        %v1186 = vld [vmem:[%s491] sm:$0xf]
        %v1187 = vld [vmem:[%s491 + $0x4] sm:$0xf]
        %v1188 = vld [vmem:[%s491 + $0x8] sm:$0xf]
        %v1189 = vld [vmem:[%s491 + $0xc] sm:$0xf]
        %v1190 = vld [vmem:[%s494] sm:$0x1]
        %v1192 = vlaneseq
        %v1193 = vshrl.u32 %v1192, 7
        %v1194 = vsub.s32 0, %v1193
        %v1195 = vrot.slane %v1190, %v1194
        %v1201 = vunpack.c.l.b16 %v1186
        %v1202 = vunpack.c.l.b16 %v1187
        %v1203 = vunpack.c.l.b16 %v1188
        %v1204 = vunpack.c.l.b16 %v1189
        %v1205 = vpack.c.b16 %v1202, %v1201
        %v1206 = vpack.c.b16 %v1204, %v1203
        %vm1209 = vcmask 261120
        %v1211 = vsel %vm1209, %v1185, 0
        %1213 = vmatprep.subr.bf16.mxu0 0
        %1214 = vmatpush1.bf16.msra.mxu0 %v1205
        %1215 = vmatprep.subr.bf16.mxu0 0
        %1216 = vmatpush1.bf16.msra.mxu0 %v1206
        %1217 = vmatprep.subr.bf16.mxu0 0
        %1218 = vmatpush1.bf16.msra.mxu0 0
        %1219 = vmatprep.subr.bf16.mxu0 0
        %1220 = vmatpush1.bf16.msra.mxu0 0
        %1221 = vmatprep.subr.bf16.mxu0 0
        %1222 = vmatpush1.bf16.msra.mxu0 0
        %1223 = vmatprep.subr.bf16.mxu0 0
        %1224 = vmatpush1.bf16.msra.mxu0 0
        %1225 = vmatprep.subr.bf16.mxu0 0
        %1226 = vmatpush1.bf16.msra.mxu0 0
        %1227 = vmatprep.subr.bf16.mxu0 0
        %1228 = vmatpush1.bf16.msra.mxu0 0
        %1229 = vmatprep.subr.bf16.mxu0 0
        %1230 = vmatpush1.bf16.msra.mxu0 0
        %1231 = vmatprep.subr.bf16.mxu0 0
        %1232 = vmatpush1.bf16.msra.mxu0 0
        %1233 = vmatprep.subr.bf16.mxu0 0
        %1234 = vmatpush1.bf16.msra.mxu0 0
        %1235 = vmatprep.subr.bf16.mxu0 0
        %1236 = vmatpush1.bf16.msra.mxu0 0
        %1237 = vmatprep.subr.bf16.mxu0 0
        %1238 = vmatpush1.bf16.msra.mxu0 0
        %1239 = vmatprep.subr.bf16.mxu0 0
        %1240 = vmatpush1.bf16.msra.mxu0 0
        %1241 = vmatprep.subr.bf16.mxu0 0
        %1242 = vmatpush1.bf16.msra.mxu0 0
        %1243 = vmatprep.subr.bf16.mxu0 0
        %1244 = vmatpush1.bf16.msra.mxu0 0
        %1245 = vmatprep.mubr.bf16.mxu0 0
        %1246 = vmatmul.mubr.bf16.gmra.mrb[0].mxu0 %v1211
        %v1247 = vpop.f32.mrb[0].mxu0
        %v1248 = vadd.f32 %v1195, %v1247
        %v1249 = vpop.f32.mrb[0].mxu0
        %v1250 = vpop.f32.mrb[0].mxu0
        %v1251 = vpop.f32.mrb[0].mxu0
        %1252 = vdwg.mxu0
        %v1253 = vmul.f32 %v1248, 0.5
        %v1254 = vmul.f32 %v1248, 0.70710677
        %v1255 = verf.f32.pop %v1254
        %v1256 = vadd.f32 %v1255, 1.0
        %v1257 = vmul.f32 %v1253, %v1256
        %v1258 = vld [vmem:[#allocation3] sm:$0xff]
        %v1259 = vpack.c.bf16 %v1257, %v1257
        %v1260 = vld [vmem:[%s499] sm:$0xf]
        %v1261 = vld [vmem:[%s499 + $0x4] sm:$0xf]
        %v1262 = vld [vmem:[%s499 + $0x8] sm:$0xf]
        %v1263 = vld [vmem:[%s499 + $0xc] sm:$0xf]
        %v1264 = vld [vmem:[%s499 + $0x10] sm:$0xf]
        %v1265 = vld [vmem:[%s499 + $0x14] sm:$0xf]
        %v1266 = vld [vmem:[%s499 + $0x18] sm:$0xf]
        %v1267 = vld [vmem:[%s499 + $0x1c] sm:$0xf]
        %v1268 = vld [vmem:[%s499 + $0x20] sm:$0xf]
        %v1269 = vld [vmem:[%s499 + $0x24] sm:$0xf]
        %v1270 = vld [vmem:[%s499 + $0x28] sm:$0xf]
        %v1271 = vld [vmem:[%s499 + $0x2c] sm:$0xf]
        %v1272 = vld [vmem:[%s499 + $0x30] sm:$0xf]
        %v1273 = vld [vmem:[%s499 + $0x34] sm:$0xf]
        %v1274 = vld [vmem:[%s499 + $0x38] sm:$0xf]
        %v1275 = vld [vmem:[%s499 + $0x3c] sm:$0xf]
        %v1292 = vunpack.c.l.b16 %v1260
        %v1293 = vunpack.c.l.b16 %v1261
        %v1294 = vunpack.c.l.b16 %v1262
        %v1295 = vunpack.c.l.b16 %v1263
        %v1296 = vunpack.c.l.b16 %v1264
        %v1297 = vunpack.c.l.b16 %v1265
        %v1298 = vunpack.c.l.b16 %v1266
        %v1299 = vunpack.c.l.b16 %v1267
        %v1300 = vunpack.c.l.b16 %v1268
        %v1301 = vunpack.c.l.b16 %v1269
        %v1302 = vunpack.c.l.b16 %v1270
        %v1303 = vunpack.c.l.b16 %v1271
        %v1304 = vunpack.c.l.b16 %v1272
        %v1305 = vunpack.c.l.b16 %v1273
        %v1306 = vunpack.c.l.b16 %v1274
        %v1307 = vunpack.c.l.b16 %v1275
        %v1308 = vpack.c.b16 %v1293, %v1292
        %v1309 = vpack.c.b16 %v1295, %v1294
        %v1310 = vpack.c.b16 %v1297, %v1296
        %v1311 = vpack.c.b16 %v1299, %v1298
        %v1312 = vpack.c.b16 %v1301, %v1300
        %v1313 = vpack.c.b16 %v1303, %v1302
        %v1314 = vpack.c.b16 %v1305, %v1304
        %v1315 = vpack.c.b16 %v1307, %v1306
        %1324 = vmatprep.subr.bf16.mxu0 0
        %1325 = vmatpush1.bf16.msra.mxu0 %v1308
        %1326 = vmatprep.subr.bf16.mxu0 0
        %1327 = vmatpush1.bf16.msra.mxu0 %v1309
        %1328 = vmatprep.subr.bf16.mxu0 0
        %1329 = vmatpush1.bf16.msra.mxu0 %v1310
        %1330 = vmatprep.subr.bf16.mxu0 0
        %1331 = vmatpush1.bf16.msra.mxu0 %v1311
        %1332 = vmatprep.subr.bf16.mxu0 0
        %1333 = vmatpush1.bf16.msra.mxu0 %v1312
        %1334 = vmatprep.subr.bf16.mxu0 0
        %1335 = vmatpush1.bf16.msra.mxu0 %v1313
        %1336 = vmatprep.subr.bf16.mxu0 0
        %1337 = vmatpush1.bf16.msra.mxu0 %v1314
        %1338 = vmatprep.subr.bf16.mxu0 0
        %1339 = vmatpush1.bf16.msra.mxu0 %v1315
        %1340 = vmatprep.subr.bf16.mxu0 0
        %1341 = vmatpush1.bf16.msra.mxu0 0
        %1342 = vmatprep.subr.bf16.mxu0 0
        %1343 = vmatpush1.bf16.msra.mxu0 0
        %1344 = vmatprep.subr.bf16.mxu0 0
        %1345 = vmatpush1.bf16.msra.mxu0 0
        %1346 = vmatprep.subr.bf16.mxu0 0
        %1347 = vmatpush1.bf16.msra.mxu0 0
        %1348 = vmatprep.subr.bf16.mxu0 0
        %1349 = vmatpush1.bf16.msra.mxu0 0
        %1350 = vmatprep.subr.bf16.mxu0 0
        %1351 = vmatpush1.bf16.msra.mxu0 0
        %1352 = vmatprep.subr.bf16.mxu0 0
        %1353 = vmatpush1.bf16.msra.mxu0 0
        %1354 = vmatprep.subr.bf16.mxu0 0
        %1355 = vmatpush1.bf16.msra.mxu0 0
        %1356 = vmatprep.mubr.bf16.mxu0 0
        %1357 = vmatmul.mubr.bf16.gmra.mrb[0].mxu0 %v1259
        %v1358 = vpop.f32.mrb[0].mxu0
        %v1359 = vadd.f32 0.0, %v1358
        %v1360 = vpop.f32.mrb[0].mxu0
        %v1361 = vpop.f32.mrb[0].mxu0
        %v1362 = vpop.f32.mrb[0].mxu0
        %1363 = vdwg.mxu0
        %v1364 = vadd.f32 %v1258, %v1359
        %1365 = vst.msk [vmem:[#allocation3] sm:$0xff] %vm1209, %v1364
        // Predicated region
        $region77: #{tpu_custom_call.1} parent=71 // pred_check
          %p1366 = pneg %p502
        $region78: #{tpu_custom_call.1} parent=71 // pred_check_branch
          %1368 = sbr.rel (%p1366) target = $region80
        $region79: #{tpu_custom_call.1} parent=71 // pred_region
          %v1369 = vld [vmem:[#allocation3] sm:$0xff]
          %1370 = vst.msk [vmem:[%s483] sm:$0xff] %vm1209, %v1369
        $region80: #{tpu_custom_call.1} parent=71 // pred_fallthru
          _
        %s1371 = sand.u32 %s340, 1
        %s1372 = scalar_lea.sflag [#allocation5], %s1371
        %s1373 = sand.u32 %s340, 1
        %s1374 = smul.addr %s1373, 8
        %s1375 = scalar_lea.vmem [#allocation4], %s1374
        // Predicated region
        $region81: #{tpu_custom_call.1} parent=71 // pred_check
          %p1376 = pneg %p350
        $region82: #{tpu_custom_call.1} parent=71 // pred_check_branch
          %1378 = sbr.rel (%p1376) target = $region84
        $region83: #{tpu_custom_call.1} parent=71 // pred_region
          %s1380 = ssub.s32 128, 128
          %1381 = vsyncadd %s1372, %s1380
          %s1382 = smul.addr %s31, 128
          %s1383 = scalar_lea.hbm %s13, %s1382
          %s1385 = sshll.u32 %s1375, 4
          %s1386 = int_to_ptr.vmem [resolvable:$true] %s1385
          %1388 = dma.vmem_to_hbm [thread:$0]  %s1386, 128, %s1383, %s1372
        $region84: #{tpu_custom_call.1} parent=71 // pred_fallthru
          _
      $region72: #{tpu_custom_call.1} parent=5 // pred_fallthru
        _
      %p1389 = scmp.le.s32.totalorder 2, %s22
      // Predicated region
      $region85: #{tpu_custom_call.1} parent=5 // pred_check
        %p1390 = pneg %p1389
      $region86: #{tpu_custom_call.1} parent=5 // pred_check_branch
        %1392 = sbr.rel (%p1390) target = $region88
      $region87: #{tpu_custom_call.1} parent=5 // pred_region
        %s1393 = ssub.s32 %s22, 2
        // Predicated region
        $region89: #{tpu_custom_call.1} parent=87 // pred_check
          %p1394 = pneg %p356
        $region90: #{tpu_custom_call.1} parent=87 // pred_check_branch
          %1396 = sbr.rel (%p1394) target = $region92
        $region91: #{tpu_custom_call.1} parent=87 // pred_region
          %s1397 = sand.u32 %s341, 1
          %s1398 = scalar_lea.sflag [#allocation5], %s1397
          %s1399 = sand.u32 %s341, 1
          %s1400 = smul.addr %s1399, 8
          %s1401 = scalar_lea.vmem [#allocation4], %s1400
          %1402 = dma.done %s1398, 128
        $region92: #{tpu_custom_call.1} parent=87 // pred_fallthru
          _
      $region88: #{tpu_custom_call.1} parent=5 // pred_fallthru
        _
    $region6: #{tpu_custom_call.1} parent=1 // loop_footer
      %s26 = sadd.s32 1, %s22
    $region7: #{tpu_custom_call.1} parent=1 // loop_footer_branch
      %21 = sbr.rel target = $region3
    $region8: #{tpu_custom_call.1} parent=1 // loop_exit
      _
    %1403 = vsyncpa [#allocation5], 1
    %s1404 = scalar_lea.sflag [#allocation5], 1
    %1405 = vsyncpa %s1404, 1

</llo_original>
